<compile_context>
chip_gen: v6e
topology: v6e:2x2x1
jax: 0.10.0
libtpu: 0.0.40
codegen_flags: <defaults>
</compile_context>

<pallas_src>
import math
from functools import partial

import jax
import jax.numpy as jnp
from jax import lax
from jax.experimental import pallas as pl
from jax.experimental.pallas import tpu as pltpu


# ------------------------- per-generation tiling config ---------------------

def _detect_vmem_bytes():
    try:
        info = pltpu.get_tpu_info()
        cap = getattr(info, "vmem_capacity_bytes", None)
        if cap:
            return int(cap)
    except Exception:
        pass
    return 64 * 1024 * 1024          # conservative default (v7x-sized)


_VMEM_PHYS = _detect_vmem_bytes()
if _VMEM_PHYS >= 128 * 1024 * 1024:          # v5e / v6e: 128 MiB physical VMEM
    _VMEM_LIMIT = 96 * 1024 * 1024
    _TM_TARGET, _TN_TARGET = 512, 1024
else:                                        # v7x: 64 MiB physical (or unknown)
    _VMEM_LIMIT = 40 * 1024 * 1024
    _TM_TARGET, _TN_TARGET = 256, 512
_VMEM_BUDGET = int(_VMEM_LIMIT * 0.7)        # headroom for pipeline buffers


def _round_up(x, m):
    return ((x + m - 1) // m) * m


def _pick_tile(dim, target, align):
    """Largest multiple of `align` <= target that divides dim, else full dim."""
    if dim <= target:
        return dim
    t = (target // align) * align
    while t >= align:
        if dim % t == 0:
            return t
        t -= align
    return dim


def _choose_tm(M, target):
    """Row tile (16-aligned for bf16 sublanes). M is padded up to a multiple of
    the returned tile; prefer the largest tile with <= 15% padding waste."""
    if M <= target:
        return max(16, _round_up(M, 16))
    best_t, best_mp = None, None
    t = target
    while t >= 128:
        mp = _round_up(M, t)
        if best_mp is None or mp < best_mp:
            best_t, best_mp = t, mp
        if (mp - M) <= 0.15 * M:
            return t
        t //= 2
    return best_t


def _choose_tk(tm, K, tn, has_res, out_bytes):
    """Full-K reduction when the double-buffered blocks fit the VMEM budget."""
    def est(tk):
        v = 2 * tm * tk * 2            # x block, bf16, double-buffered
        v += 2 * tk * tn * 2           # w block, bf16
        v += 2 * tn * 4                # bias
        v += 2 * tm * tn * out_bytes   # output block
        v += tm * tn * 4               # f32 accumulator scratch
        if has_res:
            v += 2 * tm * tn * 4
        return v
    if est(K) <= _VMEM_BUDGET:
        return K
    return _pick_tile(K, 512, 128)


def _pad_rows(a, Mp):
    M = a.shape[0]
    if Mp == M:
        return a
    return jnp.pad(a, ((0, Mp - M), (0, 0)))


# ------------------------------ Pallas kernels -------------------------------

def _matmul_kernel(x_ref, w_ref, b_ref, o_ref, acc_ref):
    # out = x @ w + b ; bf16 operands, f32 accumulate over the K grid axis.
    @pl.when(pl.program_id(2) == 0)
    def _():
        acc_ref[...] = jnp.zeros_like(acc_ref)

    acc_ref[...] += jnp.dot(x_ref[...], w_ref[...],
                            preferred_element_type=jnp.float32)

    @pl.when(pl.program_id(2) == pl.num_programs(2) - 1)
    def _():
        o_ref[...] = (acc_ref[...] + b_ref[...]).astype(o_ref.dtype)


def _matmul_residual_kernel(x_ref, w_ref, b_ref, r_ref, o_ref, acc_ref):
    # out = x @ w + b + residual (residual add fused into the matmul epilogue)
    @pl.when(pl.program_id(2) == 0)
    def _():
        acc_ref[...] = jnp.zeros_like(acc_ref)

    acc_ref[...] += jnp.dot(x_ref[...], w_ref[...],
                            preferred_element_type=jnp.float32)

    @pl.when(pl.program_id(2) == pl.num_programs(2) - 1)
    def _():
        o_ref[...] = (acc_ref[...] + b_ref[...] + r_ref[...]).astype(o_ref.dtype)


def _tiled_linear(x, w, b, res=None, *, out_dtype=jnp.float32):
    """x: (M, K) -> bf16, w: (K, N) -> bf16, b: (1, N) f32, res: (M, N) f32."""
    M, K = x.shape
    N = w.shape[1]
    x = x.astype(jnp.bfloat16)
    w = w.astype(jnp.bfloat16)

    tm = _choose_tm(M, _TM_TARGET)
    Mp = _round_up(M, tm)
    tn = _pick_tile(N, _TN_TARGET, 128)
    tk = _choose_tk(tm, K, tn, res is not None, jnp.dtype(out_dtype).itemsize)

    xp = _pad_rows(x, Mp)
    grid = (Mp // tm, N // tn, K // tk)

    in_specs = [
        pl.BlockSpec((tm, tk), lambda i, j, k: (i, k)),
        pl.BlockSpec((tk, tn), lambda i, j, k: (k, j)),
        pl.BlockSpec((1, tn), lambda i, j, k: (0, j)),
    ]
    args = [xp, w, b]
    if res is not None:
        in_specs.append(pl.BlockSpec((tm, tn), lambda i, j, k: (i, j)))
        args.append(_pad_rows(res.astype(jnp.float32), Mp))
        kernel = _matmul_residual_kernel
    else:
        kernel = _matmul_kernel

    out = pl.pallas_call(
        kernel,
        out_shape=jax.ShapeDtypeStruct((Mp, N), out_dtype),
        grid=grid,
        in_specs=in_specs,
        out_specs=pl.BlockSpec((tm, tn), lambda i, j, k: (i, j)),
        scratch_shapes=[pltpu.VMEM((tm, tn), jnp.float32)],
        compiler_params=pltpu.CompilerParams(
            dimension_semantics=("parallel", "parallel", "arbitrary"),
            vmem_limit_bytes=_VMEM_LIMIT,
        ),
    )(*args)
    return out[:M] if Mp != M else out


def _ln_matmul_kernel(x_ref, g_ref, bln_ref, w_ref, b_ref, o_ref, h_ref, *,
                      activation):
    # LayerNorm (f32) computed once per row tile into a bf16 VMEM scratch
    # (pl.when j == 0) and reused for every N tile; then bf16 matmul (+GELU).
    @pl.when(pl.program_id(1) == 0)
    def _():
        x = x_ref[...]
        mean = jnp.mean(x, axis=-1, keepdims=True)
        xc = x - mean
        var = jnp.mean(xc * xc, axis=-1, keepdims=True)
        h = xc * lax.rsqrt(var + 1e-5) * g_ref[...] + bln_ref[...]
        h_ref[...] = h.astype(jnp.bfloat16)

    y = jnp.dot(h_ref[...], w_ref[...],
                preferred_element_type=jnp.float32) + b_ref[...]
    if activation == "gelu":
        # exact erf GELU (open_clip default nn.GELU)
        y = 0.5 * y * (1.0 + lax.erf(y * 0.7071067811865476))
    o_ref[...] = y.astype(o_ref.dtype)


def layernorm_linear(x, g, bln, w, b, *, activation=None, out_dtype=jnp.float32):
    """x: (M, K) f32; LayerNorm over K, then x_ln @ w + b (+ optional GELU)."""
    M, K = x.shape
    N = w.shape[1]
    w = w.astype(jnp.bfloat16)

    tm = _choose_tm(M, _TM_TARGET)
    Mp = _round_up(M, tm)
    tn = _pick_tile(N, _TN_TARGET, 128)
    xp = _pad_rows(x.astype(jnp.float32), Mp)
    grid = (Mp // tm, N // tn)

    out = pl.pallas_call(
        partial(_ln_matmul_kernel, activation=activation),
        out_shape=jax.ShapeDtypeStruct((Mp, N), out_dtype),
        grid=grid,
        in_specs=[
            pl.BlockSpec((tm, K), lambda i, j: (i, 0)),
            pl.BlockSpec((1, K), lambda i, j: (0, 0)),
            pl.BlockSpec((1, K), lambda i, j: (0, 0)),
            pl.BlockSpec((K, tn), lambda i, j: (0, j)),
            pl.BlockSpec((1, tn), lambda i, j: (0, j)),
        ],
        out_specs=pl.BlockSpec((tm, tn), lambda i, j: (i, j)),
        scratch_shapes=[pltpu.VMEM((tm, K), jnp.bfloat16)],
        compiler_params=pltpu.CompilerParams(
            # j (N axis) must stay sequential per core so the LN scratch
            # written at j == 0 is visible for j > 0.
            dimension_semantics=("parallel", "arbitrary"),
            vmem_limit_bytes=_VMEM_LIMIT,
        ),
    )(xp, g, bln, w, b)
    return out[:M] if Mp != M else out


def _ln_pre_kernel(x_ref, pos_ref, g_ref, b_ref, o_ref):
    # positional-embedding add fused into ln_pre (saves one HBM round trip)
    x = x_ref[0] + pos_ref[...]
    mean = jnp.mean(x, axis=-1, keepdims=True)
    xc = x - mean
    var = jnp.mean(xc * xc, axis=-1, keepdims=True)
    o_ref[0] = xc * lax.rsqrt(var + 1e-5) * g_ref[...] + b_ref[...]


def ln_pre_fused(x, pos, g, b):
    """x: (B, S, D) f32, pos: (S, D) f32 -> LayerNorm(x + pos)."""
    B, S, D = x.shape
    return pl.pallas_call(
        _ln_pre_kernel,
        out_shape=jax.ShapeDtypeStruct((B, S, D), jnp.float32),
        grid=(B,),
        in_specs=[
            pl.BlockSpec((1, S, D), lambda i: (i, 0, 0)),
            pl.BlockSpec((S, D), lambda i: (0, 0)),
            pl.BlockSpec((1, D), lambda i: (0, 0)),
            pl.BlockSpec((1, D), lambda i: (0, 0)),
        ],
        out_specs=pl.BlockSpec((1, S, D), lambda i: (i, 0, 0)),
        compiler_params=pltpu.CompilerParams(
            dimension_semantics=("parallel",),
            vmem_limit_bytes=_VMEM_LIMIT,
        ),
    )(x, pos, g, b)


def _head_group_size(heads, head_dim):
    """Heads per attention group: all heads if width <= 128 lanes, otherwise
    the smallest head count giving a ~128-lane (lane-aligned) group."""
    if heads * head_dim <= 128:
        return heads
    g = max(1, min(heads, 128 // max(1, head_dim)))
    while heads % g != 0:
        g -= 1
    return g


def _mha_kernel(qkv_ref, o_ref, *, group_heads, scale):
    # One (batch, head-group) per grid step.  The QKV weights were pre-permuted
    # so this block is [Q_group | K_group | V_group] -> 128-aligned slices.
    qkv = qkv_ref[0]                      # (S, 3*Gd) bf16
    Gd = qkv.shape[-1] // 3
    Dh = Gd // group_heads
    q_all = qkv[:, 0 * Gd:1 * Gd]
    k_all = qkv[:, 1 * Gd:2 * Gd]
    v_all = qkv[:, 2 * Gd:3 * Gd]
    outs = []
    for h in range(group_heads):          # small bounded unroll (<= 4 heads)
        lo, hi = h * Dh, (h + 1) * Dh
        qh = q_all[:, lo:hi]
        kh = k_all[:, lo:hi]
        vh = v_all[:, lo:hi]
        s = lax.dot_general(qh, kh, (((1,), (1,)), ((), ())),
                            preferred_element_type=jnp.float32) * scale
        s = s - jnp.max(s, axis=-1, keepdims=True)
        p = jnp.exp(s)
        p = p / jnp.sum(p, axis=-1, keepdims=True)   # exact divide (parity)
        outs.append(jnp.dot(p.astype(jnp.bfloat16), vh,
                            preferred_element_type=jnp.float32))
    # single lane-dense (S, Gd) store instead of per-head masked stores
    o_ref[0] = jnp.concatenate(outs, axis=-1).astype(o_ref.dtype)


def mha(qkv, heads):
    """qkv: (B, S, 3*D) bf16 in head-group-packed column order -> (B, S, D)."""
    B, S, threeD = qkv.shape
    D = threeD // 3
    Dh = D // heads
    gs = _head_group_size(heads, Dh)
    Gd = gs * Dh
    ng = heads // gs
    return pl.pallas_call(
        partial(_mha_kernel, group_heads=gs, scale=1.0 / math.sqrt(Dh)),
        out_shape=jax.ShapeDtypeStruct((B, S, D), jnp.bfloat16),
        grid=(B, ng),
        in_specs=[pl.BlockSpec((1, S, 3 * Gd), lambda b, g: (b, 0, g))],
        out_specs=pl.BlockSpec((1, S, Gd), lambda b, g: (b, 0, g)),
        compiler_params=pltpu.CompilerParams(
            dimension_semantics=("parallel", "parallel"),
            vmem_limit_bytes=_VMEM_LIMIT,
        ),
    )(qkv)


# --------------------------- model (glue in JAX) ----------------------------

class VisionTowerConfig:
    def __init__(self):
        self.image_size = 16
        self.patch_size = 8
        self.in_channels = 3
        self.width = 32          # hidden_size
        self.heads = 4
        self.layers = 3
        self.mlp_dim = 64
        self.select_layer = -2
        self.select_feature = "patch"


def init_params(cfg, key):
    ks = jax.random.split(key, 64)
    ki = iter(ks)
    std = 0.02
    C, P, W, L = cfg.in_channels, cfg.patch_size, cfg.width, cfg.layers
    bf16 = jnp.bfloat16

    def w_init(shape):
        return (jax.random.normal(next(ki), shape, jnp.float32) * std).astype(bf16)

    params = {
        # conv1 (stride==kernel==patch, no bias) flattened to (C*P*P, width)
        "patch_w": w_init((C * P * P, W)),
        "cls": jax.random.normal(next(ki), (1, 1, W), jnp.float32) * std,
        "pos": jax.random.normal(
            next(ki), ((cfg.image_size // P) ** 2 + 1, W), jnp.float32) * std,
        "ln_pre_g": jnp.ones((1, W), jnp.float32),
        "ln_pre_b": jnp.zeros((1, W), jnp.float32),
        "blocks": [],
    }
    for _ in range(L):
        blk = {
            "ln1_g": jnp.ones((1, W), jnp.float32),
            "ln1_b": jnp.zeros((1, W), jnp.float32),
            "qkv_w": w_init((W, 3 * W)),          # columns [Q | K | V]
            "qkv_b": jnp.zeros((1, 3 * W), jnp.float32),
            "proj_w": w_init((W, W)),
            "proj_b": jnp.zeros((1, W), jnp.float32),
            "ln2_g": jnp.ones((1, W), jnp.float32),
            "ln2_b": jnp.zeros((1, W), jnp.float32),
            "fc1_w": w_init((W, cfg.mlp_dim)),
            "fc1_b": jnp.zeros((1, cfg.mlp_dim), jnp.float32),
            "fc2_w": w_init((cfg.mlp_dim, W)),
            "fc2_b": jnp.zeros((1, W), jnp.float32),
        }
        params["blocks"].append(blk)
    return params


def pack_attention_params(params, cfg):
    """Offline column permutation of qkv_w / qkv_b from [Q|K|V] into
    per-head-group blocks [Q_g0 K_g0 V_g0 | Q_g1 K_g1 V_g1 | ...].
    Head order is preserved, so proj_w needs no change."""
    heads, W = cfg.heads, cfg.width
    Dh = W // heads
    gs = _head_group_size(heads, Dh)
    Gd = gs * Dh
    ng = heads // gs
    packed = dict(params)
    packed["blocks"] = []
    for blk in params["blocks"]:
        qw, qb = blk["qkv_w"], blk["qkv_b"]
        qw_q, qw_k, qw_v = qw[:, :W], qw[:, W:2 * W], qw[:, 2 * W:]
        qb_q, qb_k, qb_v = qb[:, :W], qb[:, W:2 * W], qb[:, 2 * W:]
        wcols, bcols = [], []
        for g in range(ng):
            sl = slice(g * Gd, (g + 1) * Gd)
            wcols += [qw_q[:, sl], qw_k[:, sl], qw_v[:, sl]]
            bcols += [qb_q[:, sl], qb_k[:, sl], qb_v[:, sl]]
        nb = dict(blk)
        nb["qkv_w"] = jnp.concatenate(wcols, axis=1)
        nb["qkv_b"] = jnp.concatenate(bcols, axis=1)
        packed["blocks"].append(nb)
    return packed


def patch_embed(images, patch_w, cfg):
    """images: (B, C, H, W) NCHW f32 -> (B, num_patches, width)."""
    B, C, H, Wimg = images.shape
    P = cfg.patch_size
    gh, gw = H // P, Wimg // P
    K = C * P * P
    # TODO(synk): fold the im2col gather into the matmul via BlockSpec index_map
    # so the patch buffer is never materialized in HBM.
    x = images.reshape(B, C, gh, P, gw, P)
    x = x.transpose(0, 2, 4, 1, 3, 5).reshape(B * gh * gw, K).astype(jnp.bfloat16)
    w = patch_w.astype(jnp.bfloat16)
    Kp = _round_up(K, 128)
    if Kp != K:                                   # keep the MXU K lane-aligned
        x = jnp.pad(x, ((0, 0), (0, Kp - K)))
        w = jnp.pad(w, ((0, Kp - K), (0, 0)))
    zero_b = jnp.zeros((1, cfg.width), jnp.float32)
    y = _tiled_linear(x, w, zero_b)               # conv as matmul
    return y.reshape(B, gh * gw, cfg.width)


def transformer_block(x2d, blk, cfg, B, S):
    """x2d: (B*S, D) f32 -> (B*S, D) f32. Pre-norm block, fused kernels."""
    D = cfg.width
    # --- attention: ln_1 fused into QKV projection, residual fused into proj --
    qkv = layernorm_linear(x2d, blk["ln1_g"], blk["ln1_b"],
                           blk["qkv_w"], blk["qkv_b"], out_dtype=jnp.bfloat16)
    attn = mha(qkv.reshape(B, S, 3 * D), cfg.heads)            # (B, S, D) bf16
    x2d = _tiled_linear(attn.reshape(B * S, D), blk["proj_w"], blk["proj_b"],
                        res=x2d)
    # --- MLP: ln_2 + GELU fused into fc1, residual fused into fc2 ---
    h = layernorm_linear(x2d, blk["ln2_g"], blk["ln2_b"],
                         blk["fc1_w"], blk["fc1_b"],
                         activation="gelu", out_dtype=jnp.bfloat16)
    x2d = _tiled_linear(h, blk["fc2_w"], blk["fc2_b"], res=x2d)
    return x2d


def clip_vision_tower_forward(images, params, cfg):
    """Replicates CLIPVisionTower.forward(images) for a batched tensor input.
    (The torch list-of-images path is just this applied per image.)"""
    in_dtype = images.dtype
    x = images.astype(jnp.float32)
    B = x.shape[0]
    D = cfg.width

    # patch embedding + CLS; positional add is fused into ln_pre
    x = patch_embed(x, params["patch_w"], cfg)                  # (B, nP, D)
    cls = jnp.broadcast_to(params["cls"].astype(jnp.float32), (B, 1, D))
    x = jnp.concatenate([cls, x], axis=1)                       # (B, S, D)
    S = x.shape[1]

    # ln_pre(x + pos) (hidden_states[0] in this open_clip fork)
    x = ln_pre_fused(x, params["pos"].astype(jnp.float32),
                     params["ln_pre_g"], params["ln_pre_b"])
    x2d = x.reshape(B * S, D)

    # hidden_states = [ln_pre output] + [output of each block]; only
    # hidden_states[select_layer] is consumed, so skip the dead tail blocks.
    L = len(params["blocks"])
    idx = cfg.select_layer if cfg.select_layer >= 0 else (L + 1) + cfg.select_layer
    assert 0 <= idx <= L, "select_layer out of range"
    for blk in params["blocks"][:idx]:
        x2d = transformer_block(x2d, blk, cfg, B, S)

    feats = x2d.reshape(B, S, D)
    if cfg.select_feature == "patch":
        feats = feats[:, 1:]
    elif cfg.select_feature == "cls_patch":
        pass
    else:
        raise ValueError(f"Unexpected select feature: {cfg.select_feature}")
    return feats.astype(in_dtype)


# ------------------------- pure-JAX reference (check) ------------------------

def _reference_forward(images, params, cfg):
    """Pure-JAX reference with the same bf16 cast points (unpacked weights)."""
    bf16, f32 = jnp.bfloat16, jnp.float32
    x = images.astype(f32)
    B, C, H, Wimg = x.shape
    P = cfg.patch_size
    gh, gw = H // P, Wimg // P
    x = x.reshape(B, C, gh, P, gw, P).transpose(0, 2, 4, 1, 3, 5)
    x = x.reshape(B, gh * gw, C * P * P)
    x = jnp.einsum("bpk,kd->bpd", x.astype(bf16),
                   params["patch_w"].astype(bf16), preferred_element_type=f32)
    cls = jnp.broadcast_to(params["cls"], (B, 1, cfg.width))
    x = jnp.concatenate([cls, x], axis=1) + params["pos"][None]

    def ln(v, g, b):
        m = jnp.mean(v, -1, keepdims=True)
        vc = v - m
        var = jnp.mean(vc * vc, -1, keepdims=True)
        return vc * lax.rsqrt(var + 1e-5) * g + b

    x = ln(x, params["ln_pre_g"], params["ln_pre_b"])
    D, Hh = cfg.width, cfg.heads
    Dh = D // Hh
    L = len(params["blocks"])
    idx = cfg.select_layer if cfg.select_layer >= 0 else (L + 1) + cfg.select_layer
    for blk in params["blocks"][:idx]:
        h = ln(x, blk["ln1_g"], blk["ln1_b"]).astype(bf16)
        qkv = jnp.einsum("bsk,kn->bsn", h, blk["qkv_w"].astype(bf16),
                         preferred_element_type=f32) + blk["qkv_b"]
        qkv = qkv.astype(bf16)
        Bq, Sq, _ = qkv.shape
        q = qkv[..., :D].reshape(Bq, Sq, Hh, Dh)
        k = qkv[..., D:2 * D].reshape(Bq, Sq, Hh, Dh)
        v = qkv[..., 2 * D:].reshape(Bq, Sq, Hh, Dh)
        s = jnp.einsum("bqhd,bkhd->bhqk", q, k,
                       preferred_element_type=f32) / math.sqrt(Dh)
        s = s - jnp.max(s, -1, keepdims=True)
        p = jnp.exp(s)
        p = p / jnp.sum(p, -1, keepdims=True)
        o = jnp.einsum("bhqk,bkhd->bqhd", p.astype(bf16), v,
                       preferred_element_type=f32)
        o = o.reshape(Bq, Sq, D).astype(bf16)
        x = x + jnp.einsum("bsd,dk->bsk", o, blk["proj_w"].astype(bf16),
                           preferred_element_type=f32) + blk["proj_b"]
        h = ln(x, blk["ln2_g"], blk["ln2_b"]).astype(bf16)
        y = jnp.einsum("bsk,kn->bsn", h, blk["fc1_w"].astype(bf16),
                       preferred_element_type=f32) + blk["fc1_b"]
        y = 0.5 * y * (1.0 + lax.erf(y * 0.7071067811865476))
        y = y.astype(bf16)
        x = x + jnp.einsum("bsn,nk->bsk", y, blk["fc2_w"].astype(bf16),
                           preferred_element_type=f32) + blk["fc2_b"]
    if cfg.select_feature == "patch":
        x = x[:, 1:]
    return x.astype(images.dtype)


# ---------------------------------- main -------------------------------------

if __name__ == "__main__":
    cfg = VisionTowerConfig()
    key = jax.random.PRNGKey(0)
    k_img, k_par = jax.random.split(key)

    # small NCHW image batch, like the PyTorch module would receive
    images = jax.random.normal(k_img, (2, 3, 16, 16), jnp.float32)
    params = init_params(cfg, k_par)
    packed = pack_attention_params(params, cfg)   # offline weight permutation

    forward = jax.jit(lambda imgs, p: clip_vision_tower_forward(imgs, p, cfg))
    out = jax.block_until_ready(forward(images, packed))

    nP = (cfg.image_size // cfg.patch_size) ** 2
    assert out.shape == (2, nP, cfg.width), out.shape
    assert out.dtype == images.dtype
    assert bool(jnp.all(jnp.isfinite(out)))

    ref = _reference_forward(images, params, cfg)
    err = float(jnp.max(jnp.abs(out.astype(jnp.float32) - ref.astype(jnp.float32))))
    assert err < 2e-2, f"mismatch vs pure-JAX reference: max abs err = {err}"

    print("KERNEL_OK")
</pallas_src>

<mosaic_0001>
module attributes {stable_mosaic.version = 11 : i64} {
  func.func @_matmul_kernel(%arg0: i32, %arg1: i32, %arg2: i32, %arg3: memref<16x256xbf16, #tpu.memory_space<vmem>>, %arg4: memref<256x32xbf16, #tpu.memory_space<vmem>>, %arg5: memref<1x32xf32, #tpu.memory_space<vmem>>, %arg6: memref<16x32xf32, #tpu.memory_space<vmem>>, %arg7: memref<16x32xf32, #tpu.memory_space<vmem>>) attributes {dimension_semantics = [#tpu.dimension_semantics<parallel>, #tpu.dimension_semantics<parallel>, #tpu.dimension_semantics<arbitrary>], iteration_bounds = array<i64: 1, 1, 1>, scalar_prefetch = 0 : i64, scratch_operands = 1 : i64, tpu.core_type = #tpu.core_type<tc>, window_params = [{transform_indices = @transform_0, window_bounds = array<i64: 16, 256>}, {transform_indices = @transform_1, window_bounds = array<i64: 256, 32>}, {transform_indices = @transform_2, window_bounds = array<i64: 1, 32>}, {transform_indices = @transform_3, window_bounds = array<i64: 16, 32>}]} {
    %c0_i32 = arith.constant 0 : i32
    %0 = arith.cmpi eq, %arg2, %c0_i32 : i32
    %1 = arith.extui %0 : i1 to i32
    %c0_i32_0 = arith.constant 0 : i32
    %2 = arith.cmpi ne, %1, %c0_i32_0 : i32
    scf.if %2 {
      %cst_10 = arith.constant 0.000000e+00 : f32
      %12 = vector.broadcast %cst_10 : f32 to vector<16x32xf32>
      %c0_11 = arith.constant 0 : index
      %c0_12 = arith.constant 0 : index
      %13 = vector.load %arg7[%c0_11, %c0_12] : memref<16x32xf32, #tpu.memory_space<vmem>>, vector<16x32xf32>
      tpu.vector_store %arg7[%c0_11, %c0_12], %12 {strides = array<i32>} : memref<16x32xf32, #tpu.memory_space<vmem>>, vector<16x32xf32>,
    } else {
    }
    %c0 = arith.constant 0 : index
    %c0_1 = arith.constant 0 : index
    %3 = vector.load %arg7[%c0, %c0_1] : memref<16x32xf32, #tpu.memory_space<vmem>>, vector<16x32xf32>
    %c0_2 = arith.constant 0 : index
    %c0_3 = arith.constant 0 : index
    %4 = vector.load %arg3[%c0_2, %c0_3] : memref<16x256xbf16, #tpu.memory_space<vmem>>, vector<16x256xbf16>
    %c0_4 = arith.constant 0 : index
    %c0_5 = arith.constant 0 : index
    %5 = vector.load %arg4[%c0_4, %c0_5] : memref<256x32xbf16, #tpu.memory_space<vmem>>, vector<256x32xbf16>
    %cst = arith.constant dense<0.000000e+00> : vector<16x32xf32>
    %6 = tpu.matmul %4, %5, %cst {dimension_numbers = #tpu.dot_dimension_numbers<[1], [0], [0], [1], [0, 0, 1, 1], [], []>} : vector<16x256xbf16>, vector<256x32xbf16>, vector<16x32xf32> -> vector<16x32xf32>
    %7 = arith.addf %3, %6 : vector<16x32xf32>
    %c0_6 = arith.constant 0 : index
    %c0_7 = arith.constant 0 : index
    %8 = vector.load %arg7[%c0_6, %c0_7] : memref<16x32xf32, #tpu.memory_space<vmem>>, vector<16x32xf32>
    tpu.vector_store %arg7[%c0_6, %c0_7], %7 {strides = array<i32>} : memref<16x32xf32, #tpu.memory_space<vmem>>, vector<16x32xf32>,
    %c0_i32_8 = arith.constant 0 : i32
    %9 = arith.cmpi eq, %arg2, %c0_i32_8 : i32
    %10 = arith.extui %9 : i1 to i32
    %c0_i32_9 = arith.constant 0 : i32
    %11 = arith.cmpi ne, %10, %c0_i32_9 : i32
    scf.if %11 {
      %c0_10 = arith.constant 0 : index
      %c0_11 = arith.constant 0 : index
      %12 = vector.load %arg7[%c0_10, %c0_11] : memref<16x32xf32, #tpu.memory_space<vmem>>, vector<16x32xf32>
      %c0_12 = arith.constant 0 : index
      %c0_13 = arith.constant 0 : index
      %13 = vector.load %arg5[%c0_12, %c0_13] : memref<1x32xf32, #tpu.memory_space<vmem>>, vector<1x32xf32>
      %14 = vector.broadcast %13 : vector<1x32xf32> to vector<16x32xf32>
      %15 = arith.addf %12, %14 : vector<16x32xf32>
      %c0_14 = arith.constant 0 : index
      %c0_15 = arith.constant 0 : index
      %16 = vector.load %arg6[%c0_14, %c0_15] : memref<16x32xf32, #tpu.memory_space<vmem>>, vector<16x32xf32>
      tpu.vector_store %arg6[%c0_14, %c0_15], %15 {strides = array<i32>} : memref<16x32xf32, #tpu.memory_space<vmem>>, vector<16x32xf32>,
    } else {
    }
    return
  }
  func.func @transform_0(%arg0: i32, %arg1: i32, %arg2: i32) -> (i32, i32) {
    %c0_i32 = arith.constant 0 : i32
    return %arg0, %arg2 : i32, i32
  }
  func.func @transform_1(%arg0: i32, %arg1: i32, %arg2: i32) -> (i32, i32) {
    %c0_i32 = arith.constant 0 : i32
    return %arg2, %arg1 : i32, i32
  }
  func.func @transform_2(%arg0: i32, %arg1: i32, %arg2: i32) -> (i32, i32) {
    %c0_i32 = arith.constant 0 : i32
    %c0_i32_0 = arith.constant 0 : i32
    return %c0_i32, %arg1 : i32, i32
  }
  func.func @transform_3(%arg0: i32, %arg1: i32, %arg2: i32) -> (i32, i32) {
    %c0_i32 = arith.constant 0 : i32
    return %arg0, %arg1 : i32, i32
  }
}

module attributes {stable_mosaic.version = 11 : i64} {
  func.func @_ln_pre_kernel(%arg0: i32, %arg1: memref<1x5x32xf32, #tpu.memory_space<vmem>>, %arg2: memref<5x32xf32, #tpu.memory_space<vmem>>, %arg3: memref<1x32xf32, #tpu.memory_space<vmem>>, %arg4: memref<1x32xf32, #tpu.memory_space<vmem>>, %arg5: memref<1x5x32xf32, #tpu.memory_space<vmem>>) attributes {dimension_semantics = [#tpu.dimension_semantics<parallel>], iteration_bounds = array<i64: 2>, scalar_prefetch = 0 : i64, scratch_operands = 0 : i64, tpu.core_type = #tpu.core_type<tc>, window_params = [{transform_indices = @transform_0, window_bounds = array<i64: 1, 5, 32>}, {pipeline_mode = #tpu.pipeline_mode<synchronous>, transform_indices = @transform_1, window_bounds = array<i64: 5, 32>}, {pipeline_mode = #tpu.pipeline_mode<synchronous>, transform_indices = @transform_2, window_bounds = array<i64: 1, 32>}, {pipeline_mode = #tpu.pipeline_mode<synchronous>, transform_indices = @transform_3, window_bounds = array<i64: 1, 32>}, {transform_indices = @transform_4, window_bounds = array<i64: 1, 5, 32>}]} {
    %c0 = arith.constant 0 : index
    %c0_0 = arith.constant 0 : index
    %c0_1 = arith.constant 0 : index
    %0 = vector.load %arg1[%c0, %c0_0, %c0_1] : memref<1x5x32xf32, #tpu.memory_space<vmem>>, vector<1x5x32xf32>
    %1 = vector.shape_cast %0 : vector<1x5x32xf32> to vector<5x32xf32>
    %c0_2 = arith.constant 0 : index
    %c0_3 = arith.constant 0 : index
    %2 = vector.load %arg2[%c0_2, %c0_3] : memref<5x32xf32, #tpu.memory_space<vmem>>, vector<5x32xf32>
    %3 = arith.addf %1, %2 : vector<5x32xf32>
    %cst = arith.constant dense<0.000000e+00> : vector<5xf32>
    %4 = vector.multi_reduction <add>, %3, %cst [1] : vector<5x32xf32> to vector<5xf32>
    %5 = vector.shape_cast %4 : vector<5xf32> to vector<5x1xf32>
    %cst_4 = arith.constant 3.200000e+01 : f32
    %6 = vector.broadcast %cst_4 : f32 to vector<5x1xf32>
    %7 = arith.divf %5, %6 : vector<5x1xf32>
    %8 = vector.broadcast %7 : vector<5x1xf32> to vector<5x32xf32>
    %9 = arith.subf %3, %8 : vector<5x32xf32>
    %10 = arith.mulf %9, %9 : vector<5x32xf32>
    %cst_5 = arith.constant dense<0.000000e+00> : vector<5xf32>
    %11 = vector.multi_reduction <add>, %10, %cst_5 [1] : vector<5x32xf32> to vector<5xf32>
    %12 = vector.shape_cast %11 : vector<5xf32> to vector<5x1xf32>
    %cst_6 = arith.constant 3.200000e+01 : f32
    %13 = vector.broadcast %cst_6 : f32 to vector<5x1xf32>
    %14 = arith.divf %12, %13 : vector<5x1xf32>
    %cst_7 = arith.constant 9.99999974E-6 : f32
    %15 = vector.broadcast %cst_7 : f32 to vector<5x1xf32>
    %16 = arith.addf %14, %15 : vector<5x1xf32>
    %17 = math.rsqrt %16 : vector<5x1xf32>
    %18 = vector.broadcast %17 : vector<5x1xf32> to vector<5x32xf32>
    %19 = arith.mulf %9, %18 : vector<5x32xf32>
    %c0_8 = arith.constant 0 : index
    %c0_9 = arith.constant 0 : index
    %20 = vector.load %arg3[%c0_8, %c0_9] : memref<1x32xf32, #tpu.memory_space<vmem>>, vector<1x32xf32>
    %21 = vector.broadcast %20 : vector<1x32xf32> to vector<5x32xf32>
    %22 = arith.mulf %19, %21 : vector<5x32xf32>
    %c0_10 = arith.constant 0 : index
    %c0_11 = arith.constant 0 : index
    %23 = vector.load %arg4[%c0_10, %c0_11] : memref<1x32xf32, #tpu.memory_space<vmem>>, vector<1x32xf32>
    %24 = vector.broadcast %23 : vector<1x32xf32> to vector<5x32xf32>
    %25 = arith.addf %22, %24 : vector<5x32xf32>
    %c0_12 = arith.constant 0 : index
    %c0_13 = arith.constant 0 : index
    %c0_14 = arith.constant 0 : index
    %26 = vector.load %arg5[%c0_12, %c0_13, %c0_14] : memref<1x5x32xf32, #tpu.memory_space<vmem>>, vector<1x5x32xf32>
    %27 = vector.shape_cast %26 : vector<1x5x32xf32> to vector<5x32xf32>
    %28 = vector.shape_cast %25 : vector<5x32xf32> to vector<1x5x32xf32>
    tpu.vector_store %arg5[%c0_12, %c0_13, %c0_14], %28 {strides = array<i32>} : memref<1x5x32xf32, #tpu.memory_space<vmem>>, vector<1x5x32xf32>,
    return
  }
  func.func @transform_0(%arg0: i32) -> (i32, i32, i32) {
    %c0_i32 = arith.constant 0 : i32
    %c0_i32_0 = arith.constant 0 : i32
    %c0_i32_1 = arith.constant 0 : i32
    return %arg0, %c0_i32, %c0_i32_0 : i32, i32, i32
  }
  func.func @transform_1(%arg0: i32) -> (i32, i32) {
    %c0_i32 = arith.constant 0 : i32
    %c0_i32_0 = arith.constant 0 : i32
    %c0_i32_1 = arith.constant 0 : i32
    return %c0_i32, %c0_i32_0 : i32, i32
  }
  func.func @transform_2(%arg0: i32) -> (i32, i32) {
    %c0_i32 = arith.constant 0 : i32
    %c0_i32_0 = arith.constant 0 : i32
    %c0_i32_1 = arith.constant 0 : i32
    return %c0_i32, %c0_i32_0 : i32, i32
  }
  func.func @transform_3(%arg0: i32) -> (i32, i32) {
    %c0_i32 = arith.constant 0 : i32
    %c0_i32_0 = arith.constant 0 : i32
    %c0_i32_1 = arith.constant 0 : i32
    return %c0_i32, %c0_i32_0 : i32, i32
  }
  func.func @transform_4(%arg0: i32) -> (i32, i32, i32) {
    %c0_i32 = arith.constant 0 : i32
    %c0_i32_0 = arith.constant 0 : i32
    %c0_i32_1 = arith.constant 0 : i32
    return %arg0, %c0_i32, %c0_i32_0 : i32, i32, i32
  }
}

module attributes {stable_mosaic.version = 11 : i64} {
  func.func @_ln_matmul_kernel(%arg0: i32, %arg1: i32, %arg2: memref<16x32xf32, #tpu.memory_space<vmem>>, %arg3: memref<1x32xf32, #tpu.memory_space<vmem>>, %arg4: memref<1x32xf32, #tpu.memory_space<vmem>>, %arg5: memref<32x96xbf16, #tpu.memory_space<vmem>>, %arg6: memref<1x96xf32, #tpu.memory_space<vmem>>, %arg7: memref<16x96xbf16, #tpu.memory_space<vmem>>, %arg8: memref<16x32xbf16, #tpu.memory_space<vmem>>) attributes {dimension_semantics = [#tpu.dimension_semantics<parallel>, #tpu.dimension_semantics<arbitrary>], iteration_bounds = array<i64: 1, 1>, scalar_prefetch = 0 : i64, scratch_operands = 1 : i64, tpu.core_type = #tpu.core_type<tc>, window_params = [{transform_indices = @transform_0, window_bounds = array<i64: 16, 32>}, {pipeline_mode = #tpu.pipeline_mode<synchronous>, transform_indices = @transform_1, window_bounds = array<i64: 1, 32>}, {pipeline_mode = #tpu.pipeline_mode<synchronous>, transform_indices = @transform_2, window_bounds = array<i64: 1, 32>}, {transform_indices = @transform_3, window_bounds = array<i64: 32, 96>}, {transform_indices = @transform_4, window_bounds = array<i64: 1, 96>}, {transform_indices = @transform_5, window_bounds = array<i64: 16, 96>}]} {
    %c0_i32 = arith.constant 0 : i32
    %0 = arith.cmpi eq, %arg1, %c0_i32 : i32
    %1 = arith.extui %0 : i1 to i32
    %c0_i32_0 = arith.constant 0 : i32
    %2 = arith.cmpi ne, %1, %c0_i32_0 : i32
    scf.if %2 {
      %c0_8 = arith.constant 0 : index
      %c0_9 = arith.constant 0 : index
      %11 = vector.load %arg2[%c0_8, %c0_9] : memref<16x32xf32, #tpu.memory_space<vmem>>, vector<16x32xf32>
      %cst_10 = arith.constant dense<0.000000e+00> : vector<16xf32>
      %12 = vector.multi_reduction <add>, %11, %cst_10 [1] : vector<16x32xf32> to vector<16xf32>
      %13 = vector.shape_cast %12 : vector<16xf32> to vector<16x1xf32>
      %cst_11 = arith.constant 3.200000e+01 : f32
      %14 = vector.broadcast %cst_11 : f32 to vector<16x1xf32>
      %15 = arith.divf %13, %14 : vector<16x1xf32>
      %16 = vector.broadcast %15 : vector<16x1xf32> to vector<16x32xf32>
      %17 = arith.subf %11, %16 : vector<16x32xf32>
      %18 = arith.mulf %17, %17 : vector<16x32xf32>
      %cst_12 = arith.constant dense<0.000000e+00> : vector<16xf32>
      %19 = vector.multi_reduction <add>, %18, %cst_12 [1] : vector<16x32xf32> to vector<16xf32>
      %20 = vector.shape_cast %19 : vector<16xf32> to vector<16x1xf32>
      %cst_13 = arith.constant 3.200000e+01 : f32
      %21 = vector.broadcast %cst_13 : f32 to vector<16x1xf32>
      %22 = arith.divf %20, %21 : vector<16x1xf32>
      %cst_14 = arith.constant 9.99999974E-6 : f32
      %23 = vector.broadcast %cst_14 : f32 to vector<16x1xf32>
      %24 = arith.addf %22, %23 : vector<16x1xf32>
      %25 = math.rsqrt %24 : vector<16x1xf32>
      %26 = vector.broadcast %25 : vector<16x1xf32> to vector<16x32xf32>
      %27 = arith.mulf %17, %26 : vector<16x32xf32>
      %c0_15 = arith.constant 0 : index
      %c0_16 = arith.constant 0 : index
      %28 = vector.load %arg3[%c0_15, %c0_16] : memref<1x32xf32, #tpu.memory_space<vmem>>, vector<1x32xf32>
      %29 = vector.broadcast %28 : vector<1x32xf32> to vector<16x32xf32>
      %30 = arith.mulf %27, %29 : vector<16x32xf32>
      %c0_17 = arith.constant 0 : index
      %c0_18 = arith.constant 0 : index
      %31 = vector.load %arg4[%c0_17, %c0_18] : memref<1x32xf32, #tpu.memory_space<vmem>>, vector<1x32xf32>
      %32 = vector.broadcast %31 : vector<1x32xf32> to vector<16x32xf32>
      %33 = arith.addf %30, %32 : vector<16x32xf32>
      %34 = arith.truncf %33 : vector<16x32xf32> to vector<16x32xbf16>
      %c0_19 = arith.constant 0 : index
      %c0_20 = arith.constant 0 : index
      %35 = vector.load %arg8[%c0_19, %c0_20] : memref<16x32xbf16, #tpu.memory_space<vmem>>, vector<16x32xbf16>
      tpu.vector_store %arg8[%c0_19, %c0_20], %34 {strides = array<i32>} : memref<16x32xbf16, #tpu.memory_space<vmem>>, vector<16x32xbf16>,
    } else {
    }
    %c0 = arith.constant 0 : index
    %c0_1 = arith.constant 0 : index
    %3 = vector.load %arg8[%c0, %c0_1] : memref<16x32xbf16, #tpu.memory_space<vmem>>, vector<16x32xbf16>
    %c0_2 = arith.constant 0 : index
    %c0_3 = arith.constant 0 : index
    %4 = vector.load %arg5[%c0_2, %c0_3] : memref<32x96xbf16, #tpu.memory_space<vmem>>, vector<32x96xbf16>
    %cst = arith.constant dense<0.000000e+00> : vector<16x96xf32>
    %5 = tpu.matmul %3, %4, %cst {dimension_numbers = #tpu.dot_dimension_numbers<[1], [0], [0], [1], [0, 0, 1, 1], [], []>} : vector<16x32xbf16>, vector<32x96xbf16>, vector<16x96xf32> -> vector<16x96xf32>
    %c0_4 = arith.constant 0 : index
    %c0_5 = arith.constant 0 : index
    %6 = vector.load %arg6[%c0_4, %c0_5] : memref<1x96xf32, #tpu.memory_space<vmem>>, vector<1x96xf32>
    %7 = vector.broadcast %6 : vector<1x96xf32> to vector<16x96xf32>
    %8 = arith.addf %5, %7 : vector<16x96xf32>
    %9 = arith.truncf %8 : vector<16x96xf32> to vector<16x96xbf16>
    %c0_6 = arith.constant 0 : index
    %c0_7 = arith.constant 0 : index
    %10 = vector.load %arg7[%c0_6, %c0_7] : memref<16x96xbf16, #tpu.memory_space<vmem>>, vector<16x96xbf16>
    tpu.vector_store %arg7[%c0_6, %c0_7], %9 {strides = array<i32>} : memref<16x96xbf16, #tpu.memory_space<vmem>>, vector<16x96xbf16>,
    return
  }
  func.func @transform_0(%arg0: i32, %arg1: i32) -> (i32, i32) {
    %c0_i32 = arith.constant 0 : i32
    %c0_i32_0 = arith.constant 0 : i32
    return %arg0, %c0_i32 : i32, i32
  }
  func.func @transform_1(%arg0: i32, %arg1: i32) -> (i32, i32) {
    %c0_i32 = arith.constant 0 : i32
    %c0_i32_0 = arith.constant 0 : i32
    %c0_i32_1 = arith.constant 0 : i32
    return %c0_i32, %c0_i32_0 : i32, i32
  }
  func.func @transform_2(%arg0: i32, %arg1: i32) -> (i32, i32) {
    %c0_i32 = arith.constant 0 : i32
    %c0_i32_0 = arith.constant 0 : i32
    %c0_i32_1 = arith.constant 0 : i32
    return %c0_i32, %c0_i32_0 : i32, i32
  }
  func.func @transform_3(%arg0: i32, %arg1: i32) -> (i32, i32) {
    %c0_i32 = arith.constant 0 : i32
    %c0_i32_0 = arith.constant 0 : i32
    return %c0_i32, %arg1 : i32, i32
  }
  func.func @transform_4(%arg0: i32, %arg1: i32) -> (i32, i32) {
    %c0_i32 = arith.constant 0 : i32
    %c0_i32_0 = arith.constant 0 : i32
    return %c0_i32, %arg1 : i32, i32
  }
  func.func @transform_5(%arg0: i32, %arg1: i32) -> (i32, i32) {
    %c0_i32 = arith.constant 0 : i32
    return %arg0, %arg1 : i32, i32
  }
}

module attributes {stable_mosaic.version = 11 : i64} {
  func.func @_mha_kernel(%arg0: i32, %arg1: i32, %arg2: memref<1x5x96xbf16, #tpu.memory_space<vmem>>, %arg3: memref<1x5x32xbf16, #tpu.memory_space<vmem>>) attributes {dimension_semantics = [#tpu.dimension_semantics<parallel>, #tpu.dimension_semantics<parallel>], iteration_bounds = array<i64: 2, 1>, scalar_prefetch = 0 : i64, scratch_operands = 0 : i64, tpu.core_type = #tpu.core_type<tc>, window_params = [{transform_indices = @transform_0, window_bounds = array<i64: 1, 5, 96>}, {transform_indices = @transform_1, window_bounds = array<i64: 1, 5, 32>}]} {
    %c0 = arith.constant 0 : index
    %c0_0 = arith.constant 0 : index
    %c0_1 = arith.constant 0 : index
    %0 = vector.load %arg2[%c0, %c0_0, %c0_1] : memref<1x5x96xbf16, #tpu.memory_space<vmem>>, vector<1x5x96xbf16>
    %1 = vector.shape_cast %0 : vector<1x5x96xbf16> to vector<5x96xbf16>
    %2 = vector.extract_strided_slice %1 {offsets = [0, 0], sizes = [5, 32], strides = [1, 1]} : vector<5x96xbf16> to vector<5x32xbf16>
    %3 = vector.extract_strided_slice %1 {offsets = [0, 32], sizes = [5, 32], strides = [1, 1]} : vector<5x96xbf16> to vector<5x32xbf16>
    %4 = vector.extract_strided_slice %1 {offsets = [0, 64], sizes = [5, 32], strides = [1, 1]} : vector<5x96xbf16> to vector<5x32xbf16>
    %5 = vector.extract_strided_slice %2 {offsets = [0, 0], sizes = [5, 8], strides = [1, 1]} : vector<5x32xbf16> to vector<5x8xbf16>
    %6 = vector.extract_strided_slice %3 {offsets = [0, 0], sizes = [5, 8], strides = [1, 1]} : vector<5x32xbf16> to vector<5x8xbf16>
    %7 = vector.extract_strided_slice %4 {offsets = [0, 0], sizes = [5, 8], strides = [1, 1]} : vector<5x32xbf16> to vector<5x8xbf16>
    %cst = arith.constant dense<0.000000e+00> : vector<5x5xf32>
    %8 = tpu.matmul %5, %6, %cst {dimension_numbers = #tpu.dot_dimension_numbers<[1], [1], [0], [0], [0, 0, 1, 0], [], []>} : vector<5x8xbf16>, vector<5x8xbf16>, vector<5x5xf32> -> vector<5x5xf32>
    %cst_2 = arith.constant 0.353553385 : f32
    %9 = vector.broadcast %cst_2 : f32 to vector<5x5xf32>
    %10 = arith.mulf %8, %9 : vector<5x5xf32>
    %cst_3 = arith.constant dense<0xFF800000> : vector<5xf32>
    %11 = vector.multi_reduction <maximumf>, %10, %cst_3 [1] : vector<5x5xf32> to vector<5xf32>
    %12 = vector.shape_cast %11 : vector<5xf32> to vector<5x1xf32>
    %13 = vector.broadcast %12 : vector<5x1xf32> to vector<5x5xf32>
    %14 = arith.subf %10, %13 : vector<5x5xf32>
    %15 = math.exp %14 : vector<5x5xf32>
    %cst_4 = arith.constant dense<0.000000e+00> : vector<5xf32>
    %16 = vector.multi_reduction <add>, %15, %cst_4 [1] : vector<5x5xf32> to vector<5xf32>
    %17 = vector.shape_cast %16 : vector<5xf32> to vector<5x1xf32>
    %18 = vector.broadcast %17 : vector<5x1xf32> to vector<5x5xf32>
    %19 = arith.divf %15, %18 : vector<5x5xf32>
    %20 = arith.truncf %19 : vector<5x5xf32> to vector<5x5xbf16>
    %cst_5 = arith.constant dense<0.000000e+00> : vector<5x8xf32>
    %21 = tpu.matmul %20, %7, %cst_5 {dimension_numbers = #tpu.dot_dimension_numbers<[1], [0], [0], [1], [0, 0, 1, 1], [], []>} : vector<5x5xbf16>, vector<5x8xbf16>, vector<5x8xf32> -> vector<5x8xf32>
    %22 = vector.extract_strided_slice %2 {offsets = [0, 8], sizes = [5, 8], strides = [1, 1]} : vector<5x32xbf16> to vector<5x8xbf16>
    %23 = vector.extract_strided_slice %3 {offsets = [0, 8], sizes = [5, 8], strides = [1, 1]} : vector<5x32xbf16> to vector<5x8xbf16>
    %24 = vector.extract_strided_slice %4 {offsets = [0, 8], sizes = [5, 8], strides = [1, 1]} : vector<5x32xbf16> to vector<5x8xbf16>
    %cst_6 = arith.constant dense<0.000000e+00> : vector<5x5xf32>
    %25 = tpu.matmul %22, %23, %cst_6 {dimension_numbers = #tpu.dot_dimension_numbers<[1], [1], [0], [0], [0, 0, 1, 0], [], []>} : vector<5x8xbf16>, vector<5x8xbf16>, vector<5x5xf32> -> vector<5x5xf32>
    %cst_7 = arith.constant 0.353553385 : f32
    %26 = vector.broadcast %cst_7 : f32 to vector<5x5xf32>
    %27 = arith.mulf %25, %26 : vector<5x5xf32>
    %cst_8 = arith.constant dense<0xFF800000> : vector<5xf32>
    %28 = vector.multi_reduction <maximumf>, %27, %cst_8 [1] : vector<5x5xf32> to vector<5xf32>
    %29 = vector.shape_cast %28 : vector<5xf32> to vector<5x1xf32>
    %30 = vector.broadcast %29 : vector<5x1xf32> to vector<5x5xf32>
    %31 = arith.subf %27, %30 : vector<5x5xf32>
    %32 = math.exp %31 : vector<5x5xf32>
    %cst_9 = arith.constant dense<0.000000e+00> : vector<5xf32>
    %33 = vector.multi_reduction <add>, %32, %cst_9 [1] : vector<5x5xf32> to vector<5xf32>
    %34 = vector.shape_cast %33 : vector<5xf32> to vector<5x1xf32>
    %35 = vector.broadcast %34 : vector<5x1xf32> to vector<5x5xf32>
    %36 = arith.divf %32, %35 : vector<5x5xf32>
    %37 = arith.truncf %36 : vector<5x5xf32> to vector<5x5xbf16>
    %cst_10 = arith.constant dense<0.000000e+00> : vector<5x8xf32>
    %38 = tpu.matmul %37, %24, %cst_10 {dimension_numbers = #tpu.dot_dimension_numbers<[1], [0], [0], [1], [0, 0, 1, 1], [], []>} : vector<5x5xbf16>, vector<5x8xbf16>, vector<5x8xf32> -> vector<5x8xf32>
    %39 = vector.extract_strided_slice %2 {offsets = [0, 16], sizes = [5, 8], strides = [1, 1]} : vector<5x32xbf16> to vector<5x8xbf16>
    %40 = vector.extract_strided_slice %3 {offsets = [0, 16], sizes = [5, 8], strides = [1, 1]} : vector<5x32xbf16> to vector<5x8xbf16>
    %41 = vector.extract_strided_slice %4 {offsets = [0, 16], sizes = [5, 8], strides = [1, 1]} : vector<5x32xbf16> to vector<5x8xbf16>
    %cst_11 = arith.constant dense<0.000000e+00> : vector<5x5xf32>
    %42 = tpu.matmul %39, %40, %cst_11 {dimension_numbers = #tpu.dot_dimension_numbers<[1], [1], [0], [0], [0, 0, 1, 0], [], []>} : vector<5x8xbf16>, vector<5x8xbf16>, vector<5x5xf32> -> vector<5x5xf32>
    %cst_12 = arith.constant 0.353553385 : f32
    %43 = vector.broadcast %cst_12 : f32 to vector<5x5xf32>
    %44 = arith.mulf %42, %43 : vector<5x5xf32>
    %cst_13 = arith.constant dense<0xFF800000> : vector<5xf32>
    %45 = vector.multi_reduction <maximumf>, %44, %cst_13 [1] : vector<5x5xf32> to vector<5xf32>
    %46 = vector.shape_cast %45 : vector<5xf32> to vector<5x1xf32>
    %47 = vector.broadcast %46 : vector<5x1xf32> to vector<5x5xf32>
    %48 = arith.subf %44, %47 : vector<5x5xf32>
    %49 = math.exp %48 : vector<5x5xf32>
    %cst_14 = arith.constant dense<0.000000e+00> : vector<5xf32>
    %50 = vector.multi_reduction <add>, %49, %cst_14 [1] : vector<5x5xf32> to vector<5xf32>
    %51 = vector.shape_cast %50 : vector<5xf32> to vector<5x1xf32>
    %52 = vector.broadcast %51 : vector<5x1xf32> to vector<5x5xf32>
    %53 = arith.divf %49, %52 : vector<5x5xf32>
    %54 = arith.truncf %53 : vector<5x5xf32> to vector<5x5xbf16>
    %cst_15 = arith.constant dense<0.000000e+00> : vector<5x8xf32>
    %55 = tpu.matmul %54, %41, %cst_15 {dimension_numbers = #tpu.dot_dimension_numbers<[1], [0], [0], [1], [0, 0, 1, 1], [], []>} : vector<5x5xbf16>, vector<5x8xbf16>, vector<5x8xf32> -> vector<5x8xf32>
    %56 = vector.extract_strided_slice %2 {offsets = [0, 24], sizes = [5, 8], strides = [1, 1]} : vector<5x32xbf16> to vector<5x8xbf16>
    %57 = vector.extract_strided_slice %3 {offsets = [0, 24], sizes = [5, 8], strides = [1, 1]} : vector<5x32xbf16> to vector<5x8xbf16>
    %58 = vector.extract_strided_slice %4 {offsets = [0, 24], sizes = [5, 8], strides = [1, 1]} : vector<5x32xbf16> to vector<5x8xbf16>
    %cst_16 = arith.constant dense<0.000000e+00> : vector<5x5xf32>
    %59 = tpu.matmul %56, %57, %cst_16 {dimension_numbers = #tpu.dot_dimension_numbers<[1], [1], [0], [0], [0, 0, 1, 0], [], []>} : vector<5x8xbf16>, vector<5x8xbf16>, vector<5x5xf32> -> vector<5x5xf32>
    %cst_17 = arith.constant 0.353553385 : f32
    %60 = vector.broadcast %cst_17 : f32 to vector<5x5xf32>
    %61 = arith.mulf %59, %60 : vector<5x5xf32>
    %cst_18 = arith.constant dense<0xFF800000> : vector<5xf32>
    %62 = vector.multi_reduction <maximumf>, %61, %cst_18 [1] : vector<5x5xf32> to vector<5xf32>
    %63 = vector.shape_cast %62 : vector<5xf32> to vector<5x1xf32>
    %64 = vector.broadcast %63 : vector<5x1xf32> to vector<5x5xf32>
    %65 = arith.subf %61, %64 : vector<5x5xf32>
    %66 = math.exp %65 : vector<5x5xf32>
    %cst_19 = arith.constant dense<0.000000e+00> : vector<5xf32>
    %67 = vector.multi_reduction <add>, %66, %cst_19 [1] : vector<5x5xf32> to vector<5xf32>
    %68 = vector.shape_cast %67 : vector<5xf32> to vector<5x1xf32>
    %69 = vector.broadcast %68 : vector<5x1xf32> to vector<5x5xf32>
    %70 = arith.divf %66, %69 : vector<5x5xf32>
    %71 = arith.truncf %70 : vector<5x5xf32> to vector<5x5xbf16>
    %cst_20 = arith.constant dense<0.000000e+00> : vector<5x8xf32>
    %72 = tpu.matmul %71, %58, %cst_20 {dimension_numbers = #tpu.dot_dimension_numbers<[1], [0], [0], [1], [0, 0, 1, 1], [], []>} : vector<5x5xbf16>, vector<5x8xbf16>, vector<5x8xf32> -> vector<5x8xf32>
    %73 = tpu.concatenate %21, %38, %55, %72 in 1 : vector<5x8xf32>, vector<5x8xf32>, vector<5x8xf32>, vector<5x8xf32> -> vector<5x32xf32>
    %74 = arith.truncf %73 : vector<5x32xf32> to vector<5x32xbf16>
    %c0_21 = arith.constant 0 : index
    %c0_22 = arith.constant 0 : index
    %c0_23 = arith.constant 0 : index
    %75 = vector.load %arg3[%c0_21, %c0_22, %c0_23] : memref<1x5x32xbf16, #tpu.memory_space<vmem>>, vector<1x5x32xbf16>
    %76 = vector.shape_cast %75 : vector<1x5x32xbf16> to vector<5x32xbf16>
    %77 = vector.shape_cast %74 : vector<5x32xbf16> to vector<1x5x32xbf16>
    tpu.vector_store %arg3[%c0_21, %c0_22, %c0_23], %77 {strides = array<i32>} : memref<1x5x32xbf16, #tpu.memory_space<vmem>>, vector<1x5x32xbf16>,
    return
  }
  func.func @transform_0(%arg0: i32, %arg1: i32) -> (i32, i32, i32) {
    %c0_i32 = arith.constant 0 : i32
    %c0_i32_0 = arith.constant 0 : i32
    return %arg0, %c0_i32, %arg1 : i32, i32, i32
  }
  func.func @transform_1(%arg0: i32, %arg1: i32) -> (i32, i32, i32) {
    %c0_i32 = arith.constant 0 : i32
    %c0_i32_0 = arith.constant 0 : i32
    return %arg0, %c0_i32, %arg1 : i32, i32, i32
  }
}

module attributes {stable_mosaic.version = 11 : i64} {
  func.func @_matmul_residual_kernel(%arg0: i32, %arg1: i32, %arg2: i32, %arg3: memref<16x32xbf16, #tpu.memory_space<vmem>>, %arg4: memref<32x32xbf16, #tpu.memory_space<vmem>>, %arg5: memref<1x32xf32, #tpu.memory_space<vmem>>, %arg6: memref<16x32xf32, #tpu.memory_space<vmem>>, %arg7: memref<16x32xf32, #tpu.memory_space<vmem>>, %arg8: memref<16x32xf32, #tpu.memory_space<vmem>>) attributes {dimension_semantics = [#tpu.dimension_semantics<parallel>, #tpu.dimension_semantics<parallel>, #tpu.dimension_semantics<arbitrary>], iteration_bounds = array<i64: 1, 1, 1>, scalar_prefetch = 0 : i64, scratch_operands = 1 : i64, tpu.core_type = #tpu.core_type<tc>, window_params = [{transform_indices = @transform_0, window_bounds = array<i64: 16, 32>}, {transform_indices = @transform_1, window_bounds = array<i64: 32, 32>}, {transform_indices = @transform_2, window_bounds = array<i64: 1, 32>}, {transform_indices = @transform_3, window_bounds = array<i64: 16, 32>}, {transform_indices = @transform_4, window_bounds = array<i64: 16, 32>}]} {
    %c0_i32 = arith.constant 0 : i32
    %0 = arith.cmpi eq, %arg2, %c0_i32 : i32
    %1 = arith.extui %0 : i1 to i32
    %c0_i32_0 = arith.constant 0 : i32
    %2 = arith.cmpi ne, %1, %c0_i32_0 : i32
    scf.if %2 {
      %cst_10 = arith.constant 0.000000e+00 : f32
      %12 = vector.broadcast %cst_10 : f32 to vector<16x32xf32>
      %c0_11 = arith.constant 0 : index
      %c0_12 = arith.constant 0 : index
      %13 = vector.load %arg8[%c0_11, %c0_12] : memref<16x32xf32, #tpu.memory_space<vmem>>, vector<16x32xf32>
      tpu.vector_store %arg8[%c0_11, %c0_12], %12 {strides = array<i32>} : memref<16x32xf32, #tpu.memory_space<vmem>>, vector<16x32xf32>,
    } else {
    }
    %c0 = arith.constant 0 : index
    %c0_1 = arith.constant 0 : index
    %3 = vector.load %arg8[%c0, %c0_1] : memref<16x32xf32, #tpu.memory_space<vmem>>, vector<16x32xf32>
    %c0_2 = arith.constant 0 : index
    %c0_3 = arith.constant 0 : index
    %4 = vector.load %arg3[%c0_2, %c0_3] : memref<16x32xbf16, #tpu.memory_space<vmem>>, vector<16x32xbf16>
    %c0_4 = arith.constant 0 : index
    %c0_5 = arith.constant 0 : index
    %5 = vector.load %arg4[%c0_4, %c0_5] : memref<32x32xbf16, #tpu.memory_space<vmem>>, vector<32x32xbf16>
    %cst = arith.constant dense<0.000000e+00> : vector<16x32xf32>
    %6 = tpu.matmul %4, %5, %cst {dimension_numbers = #tpu.dot_dimension_numbers<[1], [0], [0], [1], [0, 0, 1, 1], [], []>} : vector<16x32xbf16>, vector<32x32xbf16>, vector<16x32xf32> -> vector<16x32xf32>
    %7 = arith.addf %3, %6 : vector<16x32xf32>
    %c0_6 = arith.constant 0 : index
    %c0_7 = arith.constant 0 : index
    %8 = vector.load %arg8[%c0_6, %c0_7] : memref<16x32xf32, #tpu.memory_space<vmem>>, vector<16x32xf32>
    tpu.vector_store %arg8[%c0_6, %c0_7], %7 {strides = array<i32>} : memref<16x32xf32, #tpu.memory_space<vmem>>, vector<16x32xf32>,
    %c0_i32_8 = arith.constant 0 : i32
    %9 = arith.cmpi eq, %arg2, %c0_i32_8 : i32
    %10 = arith.extui %9 : i1 to i32
    %c0_i32_9 = arith.constant 0 : i32
    %11 = arith.cmpi ne, %10, %c0_i32_9 : i32
    scf.if %11 {
      %c0_10 = arith.constant 0 : index
      %c0_11 = arith.constant 0 : index
      %12 = vector.load %arg8[%c0_10, %c0_11] : memref<16x32xf32, #tpu.memory_space<vmem>>, vector<16x32xf32>
      %c0_12 = arith.constant 0 : index
      %c0_13 = arith.constant 0 : index
      %13 = vector.load %arg5[%c0_12, %c0_13] : memref<1x32xf32, #tpu.memory_space<vmem>>, vector<1x32xf32>
      %14 = vector.broadcast %13 : vector<1x32xf32> to vector<16x32xf32>
      %15 = arith.addf %12, %14 : vector<16x32xf32>
      %c0_14 = arith.constant 0 : index
      %c0_15 = arith.constant 0 : index
      %16 = vector.load %arg6[%c0_14, %c0_15] : memref<16x32xf32, #tpu.memory_space<vmem>>, vector<16x32xf32>
      %17 = arith.addf %15, %16 : vector<16x32xf32>
      %c0_16 = arith.constant 0 : index
      %c0_17 = arith.constant 0 : index
      %18 = vector.load %arg7[%c0_16, %c0_17] : memref<16x32xf32, #tpu.memory_space<vmem>>, vector<16x32xf32>
      tpu.vector_store %arg7[%c0_16, %c0_17], %17 {strides = array<i32>} : memref<16x32xf32, #tpu.memory_space<vmem>>, vector<16x32xf32>,
    } else {
    }
    return
  }
  func.func @transform_0(%arg0: i32, %arg1: i32, %arg2: i32) -> (i32, i32) {
    %c0_i32 = arith.constant 0 : i32
    return %arg0, %arg2 : i32, i32
  }
  func.func @transform_1(%arg0: i32, %arg1: i32, %arg2: i32) -> (i32, i32) {
    %c0_i32 = arith.constant 0 : i32
    return %arg2, %arg1 : i32, i32
  }
  func.func @transform_2(%arg0: i32, %arg1: i32, %arg2: i32) -> (i32, i32) {
    %c0_i32 = arith.constant 0 : i32
    %c0_i32_0 = arith.constant 0 : i32
    return %c0_i32, %arg1 : i32, i32
  }
  func.func @transform_3(%arg0: i32, %arg1: i32, %arg2: i32) -> (i32, i32) {
    %c0_i32 = arith.constant 0 : i32
    return %arg0, %arg1 : i32, i32
  }
  func.func @transform_4(%arg0: i32, %arg1: i32, %arg2: i32) -> (i32, i32) {
    %c0_i32 = arith.constant 0 : i32
    return %arg0, %arg1 : i32, i32
  }
}

module attributes {stable_mosaic.version = 11 : i64} {
  func.func @_ln_matmul_kernel(%arg0: i32, %arg1: i32, %arg2: memref<16x32xf32, #tpu.memory_space<vmem>>, %arg3: memref<1x32xf32, #tpu.memory_space<vmem>>, %arg4: memref<1x32xf32, #tpu.memory_space<vmem>>, %arg5: memref<32x64xbf16, #tpu.memory_space<vmem>>, %arg6: memref<1x64xf32, #tpu.memory_space<vmem>>, %arg7: memref<16x64xbf16, #tpu.memory_space<vmem>>, %arg8: memref<16x32xbf16, #tpu.memory_space<vmem>>) attributes {dimension_semantics = [#tpu.dimension_semantics<parallel>, #tpu.dimension_semantics<arbitrary>], iteration_bounds = array<i64: 1, 1>, scalar_prefetch = 0 : i64, scratch_operands = 1 : i64, tpu.core_type = #tpu.core_type<tc>, window_params = [{transform_indices = @transform_0, window_bounds = array<i64: 16, 32>}, {pipeline_mode = #tpu.pipeline_mode<synchronous>, transform_indices = @transform_1, window_bounds = array<i64: 1, 32>}, {pipeline_mode = #tpu.pipeline_mode<synchronous>, transform_indices = @transform_2, window_bounds = array<i64: 1, 32>}, {transform_indices = @transform_3, window_bounds = array<i64: 32, 64>}, {transform_indices = @transform_4, window_bounds = array<i64: 1, 64>}, {transform_indices = @transform_5, window_bounds = array<i64: 16, 64>}]} {
    %c0_i32 = arith.constant 0 : i32
    %0 = arith.cmpi eq, %arg1, %c0_i32 : i32
    %1 = arith.extui %0 : i1 to i32
    %c0_i32_0 = arith.constant 0 : i32
    %2 = arith.cmpi ne, %1, %c0_i32_0 : i32
    scf.if %2 {
      %c0_11 = arith.constant 0 : index
      %c0_12 = arith.constant 0 : index
      %19 = vector.load %arg2[%c0_11, %c0_12] : memref<16x32xf32, #tpu.memory_space<vmem>>, vector<16x32xf32>
      %cst_13 = arith.constant dense<0.000000e+00> : vector<16xf32>
      %20 = vector.multi_reduction <add>, %19, %cst_13 [1] : vector<16x32xf32> to vector<16xf32>
      %21 = vector.shape_cast %20 : vector<16xf32> to vector<16x1xf32>
      %cst_14 = arith.constant 3.200000e+01 : f32
      %22 = vector.broadcast %cst_14 : f32 to vector<16x1xf32>
      %23 = arith.divf %21, %22 : vector<16x1xf32>
      %24 = vector.broadcast %23 : vector<16x1xf32> to vector<16x32xf32>
      %25 = arith.subf %19, %24 : vector<16x32xf32>
      %26 = arith.mulf %25, %25 : vector<16x32xf32>
      %cst_15 = arith.constant dense<0.000000e+00> : vector<16xf32>
      %27 = vector.multi_reduction <add>, %26, %cst_15 [1] : vector<16x32xf32> to vector<16xf32>
      %28 = vector.shape_cast %27 : vector<16xf32> to vector<16x1xf32>
      %cst_16 = arith.constant 3.200000e+01 : f32
      %29 = vector.broadcast %cst_16 : f32 to vector<16x1xf32>
      %30 = arith.divf %28, %29 : vector<16x1xf32>
      %cst_17 = arith.constant 9.99999974E-6 : f32
      %31 = vector.broadcast %cst_17 : f32 to vector<16x1xf32>
      %32 = arith.addf %30, %31 : vector<16x1xf32>
      %33 = math.rsqrt %32 : vector<16x1xf32>
      %34 = vector.broadcast %33 : vector<16x1xf32> to vector<16x32xf32>
      %35 = arith.mulf %25, %34 : vector<16x32xf32>
      %c0_18 = arith.constant 0 : index
      %c0_19 = arith.constant 0 : index
      %36 = vector.load %arg3[%c0_18, %c0_19] : memref<1x32xf32, #tpu.memory_space<vmem>>, vector<1x32xf32>
      %37 = vector.broadcast %36 : vector<1x32xf32> to vector<16x32xf32>
      %38 = arith.mulf %35, %37 : vector<16x32xf32>
      %c0_20 = arith.constant 0 : index
      %c0_21 = arith.constant 0 : index
      %39 = vector.load %arg4[%c0_20, %c0_21] : memref<1x32xf32, #tpu.memory_space<vmem>>, vector<1x32xf32>
      %40 = vector.broadcast %39 : vector<1x32xf32> to vector<16x32xf32>
      %41 = arith.addf %38, %40 : vector<16x32xf32>
      %42 = arith.truncf %41 : vector<16x32xf32> to vector<16x32xbf16>
      %c0_22 = arith.constant 0 : index
      %c0_23 = arith.constant 0 : index
      %43 = vector.load %arg8[%c0_22, %c0_23] : memref<16x32xbf16, #tpu.memory_space<vmem>>, vector<16x32xbf16>
      tpu.vector_store %arg8[%c0_22, %c0_23], %42 {strides = array<i32>} : memref<16x32xbf16, #tpu.memory_space<vmem>>, vector<16x32xbf16>,
    } else {
    }
    %c0 = arith.constant 0 : index
    %c0_1 = arith.constant 0 : index
    %3 = vector.load %arg8[%c0, %c0_1] : memref<16x32xbf16, #tpu.memory_space<vmem>>, vector<16x32xbf16>
    %c0_2 = arith.constant 0 : index
    %c0_3 = arith.constant 0 : index
    %4 = vector.load %arg5[%c0_2, %c0_3] : memref<32x64xbf16, #tpu.memory_space<vmem>>, vector<32x64xbf16>
    %cst = arith.constant dense<0.000000e+00> : vector<16x64xf32>
    %5 = tpu.matmul %3, %4, %cst {dimension_numbers = #tpu.dot_dimension_numbers<[1], [0], [0], [1], [0, 0, 1, 1], [], []>} : vector<16x32xbf16>, vector<32x64xbf16>, vector<16x64xf32> -> vector<16x64xf32>
    %c0_4 = arith.constant 0 : index
    %c0_5 = arith.constant 0 : index
    %6 = vector.load %arg6[%c0_4, %c0_5] : memref<1x64xf32, #tpu.memory_space<vmem>>, vector<1x64xf32>
    %7 = vector.broadcast %6 : vector<1x64xf32> to vector<16x64xf32>
    %8 = arith.addf %5, %7 : vector<16x64xf32>
    %cst_6 = arith.constant 5.000000e-01 : f32
    %9 = vector.broadcast %cst_6 : f32 to vector<16x64xf32>
    %10 = arith.mulf %9, %8 : vector<16x64xf32>
    %cst_7 = arith.constant 0.707106769 : f32
    %11 = vector.broadcast %cst_7 : f32 to vector<16x64xf32>
    %12 = arith.mulf %8, %11 : vector<16x64xf32>
    %13 = math.erf %12 : vector<16x64xf32>
    %cst_8 = arith.constant 1.000000e+00 : f32
    %14 = vector.broadcast %cst_8 : f32 to vector<16x64xf32>
    %15 = arith.addf %14, %13 : vector<16x64xf32>
    %16 = arith.mulf %10, %15 : vector<16x64xf32>
    %17 = arith.truncf %16 : vector<16x64xf32> to vector<16x64xbf16>
    %c0_9 = arith.constant 0 : index
    %c0_10 = arith.constant 0 : index
    %18 = vector.load %arg7[%c0_9, %c0_10] : memref<16x64xbf16, #tpu.memory_space<vmem>>, vector<16x64xbf16>
    tpu.vector_store %arg7[%c0_9, %c0_10], %17 {strides = array<i32>} : memref<16x64xbf16, #tpu.memory_space<vmem>>, vector<16x64xbf16>,
    return
  }
  func.func @transform_0(%arg0: i32, %arg1: i32) -> (i32, i32) {
    %c0_i32 = arith.constant 0 : i32
    %c0_i32_0 = arith.constant 0 : i32
    return %arg0, %c0_i32 : i32, i32
  }
  func.func @transform_1(%arg0: i32, %arg1: i32) -> (i32, i32) {
    %c0_i32 = arith.constant 0 : i32
    %c0_i32_0 = arith.constant 0 : i32
    %c0_i32_1 = arith.constant 0 : i32
    return %c0_i32, %c0_i32_0 : i32, i32
  }
  func.func @transform_2(%arg0: i32, %arg1: i32) -> (i32, i32) {
    %c0_i32 = arith.constant 0 : i32
    %c0_i32_0 = arith.constant 0 : i32
    %c0_i32_1 = arith.constant 0 : i32
    return %c0_i32, %c0_i32_0 : i32, i32
  }
  func.func @transform_3(%arg0: i32, %arg1: i32) -> (i32, i32) {
    %c0_i32 = arith.constant 0 : i32
    %c0_i32_0 = arith.constant 0 : i32
    return %c0_i32, %arg1 : i32, i32
  }
  func.func @transform_4(%arg0: i32, %arg1: i32) -> (i32, i32) {
    %c0_i32 = arith.constant 0 : i32
    %c0_i32_0 = arith.constant 0 : i32
    return %c0_i32, %arg1 : i32, i32
  }
  func.func @transform_5(%arg0: i32, %arg1: i32) -> (i32, i32) {
    %c0_i32 = arith.constant 0 : i32
    return %arg0, %arg1 : i32, i32
  }
}

module attributes {stable_mosaic.version = 11 : i64} {
  func.func @_matmul_residual_kernel(%arg0: i32, %arg1: i32, %arg2: i32, %arg3: memref<16x64xbf16, #tpu.memory_space<vmem>>, %arg4: memref<64x32xbf16, #tpu.memory_space<vmem>>, %arg5: memref<1x32xf32, #tpu.memory_space<vmem>>, %arg6: memref<16x32xf32, #tpu.memory_space<vmem>>, %arg7: memref<16x32xf32, #tpu.memory_space<vmem>>, %arg8: memref<16x32xf32, #tpu.memory_space<vmem>>) attributes {dimension_semantics = [#tpu.dimension_semantics<parallel>, #tpu.dimension_semantics<parallel>, #tpu.dimension_semantics<arbitrary>], iteration_bounds = array<i64: 1, 1, 1>, scalar_prefetch = 0 : i64, scratch_operands = 1 : i64, tpu.core_type = #tpu.core_type<tc>, window_params = [{transform_indices = @transform_0, window_bounds = array<i64: 16, 64>}, {transform_indices = @transform_1, window_bounds = array<i64: 64, 32>}, {transform_indices = @transform_2, window_bounds = array<i64: 1, 32>}, {transform_indices = @transform_3, window_bounds = array<i64: 16, 32>}, {transform_indices = @transform_4, window_bounds = array<i64: 16, 32>}]} {
    %c0_i32 = arith.constant 0 : i32
    %0 = arith.cmpi eq, %arg2, %c0_i32 : i32
    %1 = arith.extui %0 : i1 to i32
    %c0_i32_0 = arith.constant 0 : i32
    %2 = arith.cmpi ne, %1, %c0_i32_0 : i32
    scf.if %2 {
      %cst_10 = arith.constant 0.000000e+00 : f32
      %12 = vector.broadcast %cst_10 : f32 to vector<16x32xf32>
      %c0_11 = arith.constant 0 : index
      %c0_12 = arith.constant 0 : index
      %13 = vector.load %arg8[%c0_11, %c0_12] : memref<16x32xf32, #tpu.memory_space<vmem>>, vector<16x32xf32>
      tpu.vector_store %arg8[%c0_11, %c0_12], %12 {strides = array<i32>} : memref<16x32xf32, #tpu.memory_space<vmem>>, vector<16x32xf32>,
    } else {
    }
    %c0 = arith.constant 0 : index
    %c0_1 = arith.constant 0 : index
    %3 = vector.load %arg8[%c0, %c0_1] : memref<16x32xf32, #tpu.memory_space<vmem>>, vector<16x32xf32>
    %c0_2 = arith.constant 0 : index
    %c0_3 = arith.constant 0 : index
    %4 = vector.load %arg3[%c0_2, %c0_3] : memref<16x64xbf16, #tpu.memory_space<vmem>>, vector<16x64xbf16>
    %c0_4 = arith.constant 0 : index
    %c0_5 = arith.constant 0 : index
    %5 = vector.load %arg4[%c0_4, %c0_5] : memref<64x32xbf16, #tpu.memory_space<vmem>>, vector<64x32xbf16>
    %cst = arith.constant dense<0.000000e+00> : vector<16x32xf32>
    %6 = tpu.matmul %4, %5, %cst {dimension_numbers = #tpu.dot_dimension_numbers<[1], [0], [0], [1], [0, 0, 1, 1], [], []>} : vector<16x64xbf16>, vector<64x32xbf16>, vector<16x32xf32> -> vector<16x32xf32>
    %7 = arith.addf %3, %6 : vector<16x32xf32>
    %c0_6 = arith.constant 0 : index
    %c0_7 = arith.constant 0 : index
    %8 = vector.load %arg8[%c0_6, %c0_7] : memref<16x32xf32, #tpu.memory_space<vmem>>, vector<16x32xf32>
    tpu.vector_store %arg8[%c0_6, %c0_7], %7 {strides = array<i32>} : memref<16x32xf32, #tpu.memory_space<vmem>>, vector<16x32xf32>,
    %c0_i32_8 = arith.constant 0 : i32
    %9 = arith.cmpi eq, %arg2, %c0_i32_8 : i32
    %10 = arith.extui %9 : i1 to i32
    %c0_i32_9 = arith.constant 0 : i32
    %11 = arith.cmpi ne, %10, %c0_i32_9 : i32
    scf.if %11 {
      %c0_10 = arith.constant 0 : index
      %c0_11 = arith.constant 0 : index
      %12 = vector.load %arg8[%c0_10, %c0_11] : memref<16x32xf32, #tpu.memory_space<vmem>>, vector<16x32xf32>
      %c0_12 = arith.constant 0 : index
      %c0_13 = arith.constant 0 : index
      %13 = vector.load %arg5[%c0_12, %c0_13] : memref<1x32xf32, #tpu.memory_space<vmem>>, vector<1x32xf32>
      %14 = vector.broadcast %13 : vector<1x32xf32> to vector<16x32xf32>
      %15 = arith.addf %12, %14 : vector<16x32xf32>
      %c0_14 = arith.constant 0 : index
      %c0_15 = arith.constant 0 : index
      %16 = vector.load %arg6[%c0_14, %c0_15] : memref<16x32xf32, #tpu.memory_space<vmem>>, vector<16x32xf32>
      %17 = arith.addf %15, %16 : vector<16x32xf32>
      %c0_16 = arith.constant 0 : index
      %c0_17 = arith.constant 0 : index
      %18 = vector.load %arg7[%c0_16, %c0_17] : memref<16x32xf32, #tpu.memory_space<vmem>>, vector<16x32xf32>
      tpu.vector_store %arg7[%c0_16, %c0_17], %17 {strides = array<i32>} : memref<16x32xf32, #tpu.memory_space<vmem>>, vector<16x32xf32>,
    } else {
    }
    return
  }
  func.func @transform_0(%arg0: i32, %arg1: i32, %arg2: i32) -> (i32, i32) {
    %c0_i32 = arith.constant 0 : i32
    return %arg0, %arg2 : i32, i32
  }
  func.func @transform_1(%arg0: i32, %arg1: i32, %arg2: i32) -> (i32, i32) {
    %c0_i32 = arith.constant 0 : i32
    return %arg2, %arg1 : i32, i32
  }
  func.func @transform_2(%arg0: i32, %arg1: i32, %arg2: i32) -> (i32, i32) {
    %c0_i32 = arith.constant 0 : i32
    %c0_i32_0 = arith.constant 0 : i32
    return %c0_i32, %arg1 : i32, i32
  }
  func.func @transform_3(%arg0: i32, %arg1: i32, %arg2: i32) -> (i32, i32) {
    %c0_i32 = arith.constant 0 : i32
    return %arg0, %arg1 : i32, i32
  }
  func.func @transform_4(%arg0: i32, %arg1: i32, %arg2: i32) -> (i32, i32) {
    %c0_i32 = arith.constant 0 : i32
    return %arg0, %arg1 : i32, i32
  }
}

</mosaic_0001>

<llo_original>
// kernel: _lambda_.13
$region0: #{_lambda_.13}
  #allocation0 [shape = 'u32[]', space=smem, size = 0x4, offset = 0x4, fixed_abs, tag = 'smem constant byte address 0x4 - core index']
  #allocation1 [shape = 'u32[144,128]{1,0:T(1,128)}', space=vmem, size = 0x12000, scoped, tag = 'internal scratch']
  %s0 = inlined_call_operand.vmem [shape: f32[2,5,32], index: 0, kind: input, shape index: {}]
  %s1 = inlined_call_operand.vmem [shape: f32[5,32], index: 1, kind: input, shape index: {}]
  %s2 = inlined_call_operand.vmem [shape: f32[1,32], index: 2, kind: input, shape index: {}]
  %s3 = inlined_call_operand.vmem [shape: f32[1,32], index: 3, kind: input, shape index: {}]
  %s4 = inlined_call_operand.vmem [shape: f32[2,5,32], index: 4, kind: output, shape index: {}]
  %s5 = sld [smem:[#allocation0]]
  $region49: #{_lambda_.13} parent=0
    _
  %s7 = ssub.s32 1, %s5
  %s8 = scalar_select 0, %s7, %s5
  loop: start=0, step=1, limit=4
  $region2: #{_lambda_.13} parent=0 // loop_pre_header
    _
  $region3: #{_lambda_.13} parent=0 // loop_header
    %s10 = sphi 0, %s14
    %p11 = scmp.ge.s32.totalorder %s10, 4
    %s20 = sphi 0, %s22
    %s23 = sphi 0, %s20
    %s24 = sphi 0, %s23
    %s40 = sphi 0, %s24
    %s44 = sphi 0, %s44
    %s46 = sphi 0, %s44
    %s47 = sphi 0, %s46
    %s61 = sphi 0, %s47
    %s65 = sphi 0, %s65
    %s67 = sphi 0, %s65
    %s68 = sphi 0, %s67
    %s82 = sphi 0, %s68
    %s86 = sphi 0, %s86
    %s88 = sphi 0, %s86
    %s89 = sphi 0, %s88
    %s103 = sphi 0, %s89
    %s109 = sphi 0, %s111
    %s112 = sphi 0, %s109
    %s113 = sphi 0, %s112
    %s129 = sphi 0, %s113
  $region4: #{_lambda_.13} parent=0 // loop_header_branch
    %13 = sbr.rel (%p11) target = $region8
  $region5: #{_lambda_.13} parent=0 // loop_body
    %s15 = ssub.s32 %s10, 1
    %s16 = ssub.s32 %s10, 2
    %s17 = sadd.s32 %s10, 1
    %s18 = ssub.s32 %s10, %s17
    %p19 = scmp.eq.s32.totalorder %s18, 0
    %s21 = sadd.s32 %s20, 1
    %s22 = scalar_select %p19, %s20, %s21
    %p25 = pneg %p19
    %p26 = scmp.eq.s32.totalorder %s10, 1
    %p27 = por %p25, %p26
    %p28 = scmp.ne.s32.totalorder %s20, %s23
    %p29 = scmp.eq.s32.totalorder %s10, 0
    %p30 = por %p28, %p29
    %p31 = scmp.ne.s32.totalorder %s20, %s23
    %p32 = scmp.eq.s32.totalorder %s15, 1
    %p33 = por %p31, %p32
    %p34 = scmp.ne.s32.totalorder %s23, %s24
    %p35 = scmp.eq.s32.totalorder %s15, 0
    %p36 = por %p34, %p35
    %p37 = scmp.ne.s32.totalorder %s23, %s24
    %p38 = scmp.eq.s32.totalorder %s16, 1
    %p39 = por %p37, %p38
    %p41 = scmp.ne.s32.totalorder %s24, %s40
    %p42 = scmp.eq.s32.totalorder %s16, 0
    %p43 = por %p41, %p42
    %s45 = sadd.s32 %s44, 1
    %p48 = scmp.eq.s32.totalorder %s10, 1
    %p49 = scmp.ne.s32.totalorder %s44, %s46
    %p50 = scmp.eq.s32.totalorder %s10, 0
    %p51 = por %p49, %p50
    %p52 = scmp.ne.s32.totalorder %s44, %s46
    %p53 = scmp.eq.s32.totalorder %s15, 1
    %p54 = por %p52, %p53
    %p55 = scmp.ne.s32.totalorder %s46, %s47
    %p56 = scmp.eq.s32.totalorder %s15, 0
    %p57 = por %p55, %p56
    %p58 = scmp.ne.s32.totalorder %s46, %s47
    %p59 = scmp.eq.s32.totalorder %s16, 1
    %p60 = por %p58, %p59
    %p62 = scmp.ne.s32.totalorder %s47, %s61
    %p63 = scmp.eq.s32.totalorder %s16, 0
    %p64 = por %p62, %p63
    %s66 = sadd.s32 %s65, 1
    %p69 = scmp.eq.s32.totalorder %s10, 1
    %p70 = scmp.ne.s32.totalorder %s65, %s67
    %p71 = scmp.eq.s32.totalorder %s10, 0
    %p72 = por %p70, %p71
    %p73 = scmp.ne.s32.totalorder %s65, %s67
    %p74 = scmp.eq.s32.totalorder %s15, 1
    %p75 = por %p73, %p74
    %p76 = scmp.ne.s32.totalorder %s67, %s68
    %p77 = scmp.eq.s32.totalorder %s15, 0
    %p78 = por %p76, %p77
    %p79 = scmp.ne.s32.totalorder %s67, %s68
    %p80 = scmp.eq.s32.totalorder %s16, 1
    %p81 = por %p79, %p80
    %p83 = scmp.ne.s32.totalorder %s68, %s82
    %p84 = scmp.eq.s32.totalorder %s16, 0
    %p85 = por %p83, %p84
    %s87 = sadd.s32 %s86, 1
    %p90 = scmp.eq.s32.totalorder %s10, 1
    %p91 = scmp.ne.s32.totalorder %s86, %s88
    %p92 = scmp.eq.s32.totalorder %s10, 0
    %p93 = por %p91, %p92
    %p94 = scmp.ne.s32.totalorder %s86, %s88
    %p95 = scmp.eq.s32.totalorder %s15, 1
    %p96 = por %p94, %p95
    %p97 = scmp.ne.s32.totalorder %s88, %s89
    %p98 = scmp.eq.s32.totalorder %s15, 0
    %p99 = por %p97, %p98
    %p100 = scmp.ne.s32.totalorder %s88, %s89
    %p101 = scmp.eq.s32.totalorder %s16, 1
    %p102 = por %p100, %p101
    %p104 = scmp.ne.s32.totalorder %s89, %s103
    %p105 = scmp.eq.s32.totalorder %s16, 0
    %p106 = por %p104, %p105
    %s107 = ssub.s32 %s10, %s17
    %p108 = scmp.eq.s32.totalorder %s107, 0
    %s110 = sadd.s32 %s109, 1
    %s111 = scalar_select %p108, %s109, %s110
    %p114 = pneg %p108
    %p115 = scmp.eq.s32.totalorder %s10, 1
    %p116 = por %p114, %p115
    %p117 = scmp.ne.s32.totalorder %s109, %s112
    %p118 = scmp.eq.s32.totalorder %s10, 0
    %p119 = por %p117, %p118
    %p120 = scmp.ne.s32.totalorder %s109, %s112
    %p121 = scmp.eq.s32.totalorder %s15, 1
    %p122 = por %p120, %p121
    %p123 = scmp.ne.s32.totalorder %s112, %s113
    %p124 = scmp.eq.s32.totalorder %s15, 0
    %p125 = por %p123, %p124
    %p126 = scmp.ne.s32.totalorder %s112, %s113
    %p127 = scmp.eq.s32.totalorder %s16, 1
    %p128 = por %p126, %p127
    %p130 = scmp.ne.s32.totalorder %s113, %s129
    %p131 = scmp.eq.s32.totalorder %s16, 0
    %p132 = por %p130, %p131
    %p133 = scmp.le.s32.totalorder 1, %s10
    %p134 = scmp.lt.s32.totalorder %s10, 3
    %p135 = pnand %p133, %p134
    %p136 = pneg %p135
    // Predicated region
    $region9: #{_lambda_.13} parent=5 // pred_check
      _
    $region10: #{_lambda_.13} parent=5 // pred_check_branch
      %138 = sbr.rel (%p135) target = $region12
    $region11: #{_lambda_.13} parent=5 // pred_region
      %s139 = ssub.s32 %s10, 1
      // Predicated region
      $region13: #{_lambda_.13} parent=11 // pred_check
        %p140 = pneg %p57
      $region14: #{_lambda_.13} parent=11 // pred_check_branch
        %142 = sbr.rel (%p140) target = $region16
      $region15: #{_lambda_.13} parent=11 // pred_region
        _
      $region16: #{_lambda_.13} parent=11 // pred_fallthru
        _
      // Predicated region
      $region17: #{_lambda_.13} parent=11 // pred_check
        %p143 = pneg %p78
      $region18: #{_lambda_.13} parent=11 // pred_check_branch
        %145 = sbr.rel (%p143) target = $region20
      $region19: #{_lambda_.13} parent=11 // pred_region
        _
      $region20: #{_lambda_.13} parent=11 // pred_fallthru
        _
      // Predicated region
      $region21: #{_lambda_.13} parent=11 // pred_check
        %p146 = pneg %p99
      $region22: #{_lambda_.13} parent=11 // pred_check_branch
        %148 = sbr.rel (%p146) target = $region24
      $region23: #{_lambda_.13} parent=11 // pred_region
        _
      $region24: #{_lambda_.13} parent=11 // pred_fallthru
        _
    $region12: #{_lambda_.13} parent=5 // pred_fallthru
      _
    %p149 = scmp.lt.s32.totalorder %s10, 2
    // Predicated region
    $region25: #{_lambda_.13} parent=5 // pred_check
      %p150 = pneg %p149
    $region26: #{_lambda_.13} parent=5 // pred_check_branch
      %152 = sbr.rel (%p150) target = $region28
    $region27: #{_lambda_.13} parent=5 // pred_region
      // Predicated region
      $region29: #{_lambda_.13} parent=27 // pred_check
        %p153 = pneg %p30
      $region30: #{_lambda_.13} parent=27 // pred_check_branch
        %155 = sbr.rel (%p153) target = $region32
      $region31: #{_lambda_.13} parent=27 // pred_region
        %p156 = scmp.lt.s32.totalorder %s10, 1
        %s157 = scalar_select %p156, %s10, 1
        %s158 = smul.addr %s157, 8
        %s159 = scalar_lea.vmem %s0, %s158
      $region32: #{_lambda_.13} parent=27 // pred_fallthru
        _
    $region28: #{_lambda_.13} parent=5 // pred_fallthru
      _
    %p160 = scmp.le.s32.totalorder 1, %s10
    %p161 = scmp.lt.s32.totalorder %s10, 3
    %p162 = pnand %p160, %p161
    %p163 = pneg %p162
    // Predicated region
    $region33: #{_lambda_.13} parent=5 // pred_check
      _
    $region34: #{_lambda_.13} parent=5 // pred_check_branch
      %165 = sbr.rel (%p162) target = $region36
    $region35: #{_lambda_.13} parent=5 // pred_region
      %s166 = ssub.s32 %s10, 1
      %p167 = scmp.lt.s32.totalorder %s15, 1
      %s168 = scalar_select %p167, %s15, 1
      %s169 = smul.addr %s168, 8
      %s170 = scalar_lea.vmem %s0, %s169
      %p171 = pneg %p36
      %p172 = pneg %p33
      %p173 = pneg %p57
      %p174 = pneg %p54
      %p175 = pneg %p78
      %p176 = pneg %p75
      %p177 = pneg %p99
      %p178 = pneg %p96
      %p179 = pneg %p125
      %p180 = pneg %p122
      %p181 = scmp.lt.s32.totalorder %s15, 1
      %s182 = scalar_select %p181, %s15, 1
      %s183 = smul.addr %s182, 8
      %s184 = scalar_lea.vmem %s4, %s183
      %p185 = scmp.lt.s32.totalorder %s15, 1
      %s186 = scalar_select %p185, %s15, 1
      %s187 = smul.addr %s186, 8
      %s188 = scalar_lea.vmem %s0, %s187
      %p189 = scmp.lt.s32.totalorder %s15, 1
      %s190 = scalar_select %p189, %s15, 1
      %s191 = smul.addr %s190, 8
      %s192 = scalar_lea.vmem %s4, %s191
      %v193 = vld [vmem:[%s188] sm:$0x1f]
      %v194 = vld [vmem:[%s1] sm:$0x1f]
      %v195 = vadd.f32 %v193, %v194
      %vm196 = vcmask 258048
      %v197 = vsel %vm196, %v195, 0.0
      %198 = vadd.xlane.f32.xlu0 %v197
      %v199 = vpop.xlane.xlu0 %198
      %v200 = vrcp.pop 32.0
      %v201 = vmul.f32 %v199, %v200
      %v202 = vsub.f32 %v195, %v201
      %v203 = vmul.f32 %v202, %v202
      %v204 = vsel %vm196, %v203, 0.0
      %205 = vadd.xlane.f32.xlu0 %v204
      %v206 = vpop.xlane.xlu0 %205
      %v207 = vmul.f32 %v206, %v200
      %v208 = vadd.f32 %v207, 1e-05
      %v209 = vrsqrt.pop %v208
      %v210 = vmul.f32 %v202, %v209
      %v211 = vld [vmem:[%s2] sm:$0x1]
      %v213 = vlaneseq
      %v214 = vshrl.u32 %v213, 7
      %v215 = vsub.s32 0, %v214
      %v216 = vrot.slane %v211, %v215
      %v218 = vmul.f32 %v210, %v216
      %v219 = vld [vmem:[%s3] sm:$0x1]
      %v221 = vlaneseq
      %v222 = vshrl.u32 %v221, 7
      %v223 = vsub.s32 0, %v222
      %v224 = vrot.slane %v219, %v223
      %v226 = vadd.f32 %v218, %v224
      %227 = vst.msk [vmem:[%s192] sm:$0x1f] %vm196, %v226
      %p228 = scmp.lt.s32.totalorder %s15, 1
      %s229 = scalar_select %p228, %s15, 1
      %s230 = smul.addr %s229, 8
      %s231 = scalar_lea.vmem %s4, %s230
      // Predicated region
      $region37: #{_lambda_.13} parent=35 // pred_check
        %p232 = pneg %p122
      $region38: #{_lambda_.13} parent=35 // pred_check_branch
        %234 = sbr.rel (%p232) target = $region40
      $region39: #{_lambda_.13} parent=35 // pred_region
        _
      $region40: #{_lambda_.13} parent=35 // pred_fallthru
        _
    $region36: #{_lambda_.13} parent=5 // pred_fallthru
      _
    %p235 = scmp.le.s32.totalorder 2, %s10
    // Predicated region
    $region41: #{_lambda_.13} parent=5 // pred_check
      %p236 = pneg %p235
    $region42: #{_lambda_.13} parent=5 // pred_check_branch
      %238 = sbr.rel (%p236) target = $region44
    $region43: #{_lambda_.13} parent=5 // pred_region
      %s239 = ssub.s32 %s10, 2
      // Predicated region
      $region45: #{_lambda_.13} parent=43 // pred_check
        %p240 = pneg %p128
      $region46: #{_lambda_.13} parent=43 // pred_check_branch
        %242 = sbr.rel (%p240) target = $region48
      $region47: #{_lambda_.13} parent=43 // pred_region
        %p243 = scmp.lt.s32.totalorder %s16, 1
        %s244 = scalar_select %p243, %s16, 1
        %s245 = smul.addr %s244, 8
        %s246 = scalar_lea.vmem %s4, %s245
      $region48: #{_lambda_.13} parent=43 // pred_fallthru
        _
    $region44: #{_lambda_.13} parent=5 // pred_fallthru
      _
  $region6: #{_lambda_.13} parent=0 // loop_footer
    %s14 = sadd.s32 1, %s10
  $region7: #{_lambda_.13} parent=0 // loop_footer_branch
    %9 = sbr.rel target = $region3
  $region8: #{_lambda_.13} parent=0 // loop_exit
    _

// kernel: _lambda_.14
$region0: #{_lambda_.14}
  #allocation0 [shape = 'u32[]', space=smem, size = 0x4, offset = 0x4, fixed_abs, tag = 'smem constant byte address 0x4 - core index']
  #allocation1 [shape = 'u32[144,128]{1,0:T(1,128)}', space=vmem, size = 0x12000, scoped, tag = 'internal scratch']
  #allocation2 [shape = 'bf16[16,32]{1,0:T(8,128)(2,1)}', space=vmem, size = 0x1000, scoped, tag = 'scratch operand']
  %s0 = inlined_call_operand.vmem [shape: f32[16,32], index: 0, kind: input, shape index: {}]
  %s1 = inlined_call_operand.vmem [shape: f32[1,32], index: 1, kind: input, shape index: {}]
  %s2 = inlined_call_operand.vmem [shape: f32[1,32], index: 2, kind: input, shape index: {}]
  %s3 = inlined_call_operand.vmem [shape: bf16[32,96], index: 3, kind: input, shape index: {}]
  %s4 = inlined_call_operand.vmem [shape: f32[1,96], index: 4, kind: input, shape index: {}]
  %s5 = inlined_call_operand.vmem [shape: bf16[16,96], index: 5, kind: output, shape index: {}]
  %s6 = sld [smem:[#allocation0]]
  $region34: #{_lambda_.14} parent=0
    _
  %s8 = ssub.s32 1, %s6
  %s9 = scalar_select 0, %s8, %s6
  // Predicated region
  $region2: #{_lambda_.14} parent=0 // pred_check
    _
  $region3: #{_lambda_.14} parent=0 // pred_check_branch
    %11 = sbr.rel (0) target = $region5
  $region4: #{_lambda_.14} parent=0 // pred_region
    _
  $region5: #{_lambda_.14} parent=0 // pred_fallthru
    _
  // Predicated region
  $region6: #{_lambda_.14} parent=0 // pred_check
    _
  $region7: #{_lambda_.14} parent=0 // pred_check_branch
    %13 = sbr.rel (0) target = $region9
  $region8: #{_lambda_.14} parent=0 // pred_region
    _
  $region9: #{_lambda_.14} parent=0 // pred_fallthru
    _
  // Predicated region
  $region10: #{_lambda_.14} parent=0 // pred_check
    _
  $region11: #{_lambda_.14} parent=0 // pred_check_branch
    %15 = sbr.rel (0) target = $region13
  $region12: #{_lambda_.14} parent=0 // pred_region
    _
  $region13: #{_lambda_.14} parent=0 // pred_fallthru
    _
  // Predicated region
  $region14: #{_lambda_.14} parent=0 // pred_check
    _
  $region15: #{_lambda_.14} parent=0 // pred_check_branch
    %17 = sbr.rel (0) target = $region17
  $region16: #{_lambda_.14} parent=0 // pred_region
    _
  $region17: #{_lambda_.14} parent=0 // pred_fallthru
    _
  // Predicated region
  $region18: #{_lambda_.14} parent=0 // pred_check
    _
  $region19: #{_lambda_.14} parent=0 // pred_check_branch
    %19 = sbr.rel (0) target = $region21
  $region20: #{_lambda_.14} parent=0 // pred_region
    _
  $region21: #{_lambda_.14} parent=0 // pred_fallthru
    _
  %p21 = scmp.eq.s32.totalorder 0, 0
  // Predicated region
  $region22: #{_lambda_.14} parent=0 // pred_check
    %p22 = pneg %p21
  $region23: #{_lambda_.14} parent=0 // pred_check_branch
    %24 = sbr.rel (%p22) target = $region25
  $region24: #{_lambda_.14} parent=0 // pred_region
    %v25 = vld [vmem:[%s0] sm:$0xff]
    %v26 = vld [vmem:[%s0 + $0x8] sm:$0xff]
    %vm27 = vcmask 261120
    %v28 = vsel %vm27, %v25, 0.0
    %29 = vadd.xlane.f32.xlu0 %v28
    %v30 = vpop.xlane.xlu0 %29
    %v31 = vsel %vm27, %v26, 0.0
    %32 = vadd.xlane.f32.xlu0 %v31
    %v33 = vpop.xlane.xlu0 %32
    %v34 = vrcp.pop 32.0
    %v35 = vmul.f32 %v30, %v34
    %v36 = vmul.f32 %v33, %v34
    %v37 = vsub.f32 %v25, %v35
    %v38 = vsub.f32 %v26, %v36
    %v39 = vmul.f32 %v37, %v37
    %v40 = vmul.f32 %v38, %v38
    %v41 = vsel %vm27, %v39, 0.0
    %42 = vadd.xlane.f32.xlu0 %v41
    %v43 = vpop.xlane.xlu0 %42
    %v44 = vsel %vm27, %v40, 0.0
    %45 = vadd.xlane.f32.xlu0 %v44
    %v46 = vpop.xlane.xlu0 %45
    %v47 = vmul.f32 %v43, %v34
    %v48 = vmul.f32 %v46, %v34
    %v49 = vadd.f32 %v47, 1e-05
    %v50 = vadd.f32 %v48, 1e-05
    %v51 = vrsqrt.pop %v49
    %v52 = vrsqrt.pop %v50
    %v53 = vmul.f32 %v37, %v51
    %v54 = vmul.f32 %v38, %v52
    %v55 = vld [vmem:[%s1] sm:$0x1]
    %v57 = vlaneseq
    %v58 = vshrl.u32 %v57, 7
    %v59 = vsub.s32 0, %v58
    %v60 = vrot.slane %v55, %v59
    %v62 = vmul.f32 %v53, %v60
    %v63 = vmul.f32 %v54, %v60
    %v64 = vld [vmem:[%s2] sm:$0x1]
    %v66 = vlaneseq
    %v67 = vshrl.u32 %v66, 7
    %v68 = vsub.s32 0, %v67
    %v69 = vrot.slane %v64, %v68
    %v71 = vadd.f32 %v62, %v69
    %v72 = vadd.f32 %v63, %v69
    %v73 = vpack.c.bf16 %v72, %v71
    %v75 = vunpack.c.l.b16 %v73
    %v76 = vunpack.c.h.b16 %v73
    %v77 = vpack.c.b16 %v75, %v75
    %v78 = vpack.c.b16 %v76, %v76
    %vm81 = vcmask 257024
    %82 = vst.msk [vmem:[#allocation2] sm:$0xf] %vm81, %v77
    %83 = vst.msk [vmem:[#allocation2 + $0x4] sm:$0xf] %vm81, %v78
  $region25: #{_lambda_.14} parent=0 // pred_fallthru
    _
  %v84 = vld [vmem:[#allocation2] sm:$0xf]
  %v85 = vld [vmem:[#allocation2 + $0x4] sm:$0xf]
  %v86 = vld [vmem:[%s3] sm:$0xf]
  %v87 = vld [vmem:[%s3 + $0x4] sm:$0xf]
  %v88 = vld [vmem:[%s3 + $0x8] sm:$0xf]
  %v89 = vld [vmem:[%s3 + $0xc] sm:$0xf]
  %v90 = vld [vmem:[%s4] sm:$0x1]
  %v92 = vlaneseq
  %v93 = vshrl.u32 %v92, 7
  %v94 = vsub.s32 0, %v93
  %v95 = vrot.slane %v90, %v94
  %v99 = vunpack.c.l.b16 %v84
  %v100 = vunpack.c.l.b16 %v85
  %v101 = vpack.c.b16 %v100, %v99
  %v106 = vunpack.c.l.b16 %v86
  %v107 = vunpack.c.l.b16 %v87
  %v108 = vunpack.c.l.b16 %v88
  %v109 = vunpack.c.l.b16 %v89
  %v110 = vpack.c.b16 %v107, %v106
  %v111 = vpack.c.b16 %v109, %v108
  %vm114 = vcmask 261120
  %v116 = vsel %vm114, %v101, 0
  %118 = vmatprep.subr.bf16.mxu0 0
  %119 = vmatpush1.bf16.msra.mxu0 0
  %120 = vmatprep.subr.bf16.mxu0 0
  %121 = vmatpush1.bf16.msra.mxu0 0
  %122 = vmatprep.subr.bf16.mxu0 0
  %123 = vmatpush1.bf16.msra.mxu0 0
  %124 = vmatprep.subr.bf16.mxu0 0
  %125 = vmatpush1.bf16.msra.mxu0 0
  %126 = vmatprep.subr.bf16.mxu0 0
  %127 = vmatpush1.bf16.msra.mxu0 0
  %128 = vmatprep.subr.bf16.mxu0 0
  %129 = vmatpush1.bf16.msra.mxu0 0
  %130 = vmatprep.subr.bf16.mxu0 0
  %131 = vmatpush1.bf16.msra.mxu0 %v111
  %132 = vmatprep.subr.bf16.mxu0 0
  %133 = vmatpush1.bf16.msra.mxu0 %v110
  %134 = vmatprep.subr.bf16.mxu0 0
  %135 = vmatpush2.bf16.msra.mxu0 0
  %136 = vmatprep.subr.bf16.mxu0 0
  %137 = vmatpush2.bf16.msra.mxu0 0
  %138 = vmatprep.subr.bf16.mxu0 0
  %139 = vmatpush2.bf16.msra.mxu0 0
  %140 = vmatprep.subr.bf16.mxu0 0
  %141 = vmatpush2.bf16.msra.mxu0 0
  %142 = vmatprep.subr.bf16.mxu0 0
  %143 = vmatpush2.bf16.msra.mxu0 0
  %144 = vmatprep.subr.bf16.mxu0 0
  %145 = vmatpush2.bf16.msra.mxu0 0
  %146 = vmatprep.subr.bf16.mxu0 0
  %147 = vmatpush2.bf16.msra.mxu0 0
  %148 = vmatprep.subr.bf16.mxu0 0
  %149 = vmatpush2.bf16.msra.mxu0 0
  %150 = vmatprep.mubr.bf16.mxu0 0
  %151 = vmatmul.mubr.bf16.gmra.mxu0 %v116
  %v152 = vpop.f32.mrf.mxu0
  %v153 = vadd.f32 %v95, %v152
  %v154 = vpop.f32.mrf.mxu0
  %v155 = vpop.f32.mrf.mxu0
  %v156 = vadd.f32 %v95, %v155
  %v157 = vpop.f32.mrf.mxu0
  %158 = vdwg.mxu0
  %v159 = vpack.c.bf16 %v156, %v153
  %v161 = vunpack.c.l.b16 %v159
  %v162 = vunpack.c.h.b16 %v159
  %v163 = vpack.c.b16 %v161, %v161
  %v164 = vpack.c.b16 %v162, %v162
  %vm167 = vcmask 781312
  %168 = vst.msk [vmem:[%s5] sm:$0xf] %vm167, %v163
  %169 = vst.msk [vmem:[%s5 + $0x4] sm:$0xf] %vm167, %v164
  // Predicated region
  $region26: #{_lambda_.14} parent=0 // pred_check
    _
  $region27: #{_lambda_.14} parent=0 // pred_check_branch
    %171 = sbr.rel (0) target = $region29
  $region28: #{_lambda_.14} parent=0 // pred_region
    _
  $region29: #{_lambda_.14} parent=0 // pred_fallthru
    _
  // Predicated region
  $region30: #{_lambda_.14} parent=0 // pred_check
    _
  $region31: #{_lambda_.14} parent=0 // pred_check_branch
    %173 = sbr.rel (0) target = $region33
  $region32: #{_lambda_.14} parent=0 // pred_region
    _
  $region33: #{_lambda_.14} parent=0 // pred_fallthru
    _

// kernel: _lambda_.12
$region0: #{_lambda_.12}
  #allocation0 [shape = 'u32[]', space=smem, size = 0x4, offset = 0x4, fixed_abs, tag = 'smem constant byte address 0x4 - core index']
  #allocation1 [shape = 'u32[144,128]{1,0:T(1,128)}', space=vmem, size = 0x12000, scoped, tag = 'internal scratch']
  #allocation2 [shape = 'f32[16,32]{1,0:T(8,128)}', space=vmem, size = 0x2000, scoped, tag = 'scratch operand']
  %s0 = inlined_call_operand.vmem [shape: bf16[16,256], index: 0, kind: input, shape index: {}]
  %s1 = inlined_call_operand.vmem [shape: bf16[256,32], index: 1, kind: input, shape index: {}]
  %s2 = inlined_call_operand.vmem [shape: f32[1,32], index: 2, kind: input, shape index: {}]
  %s3 = inlined_call_operand.vmem [shape: f32[16,32], index: 3, kind: output, shape index: {}]
  %s4 = sld [smem:[#allocation0]]
  $region30: #{_lambda_.12} parent=0
    _
  %s6 = ssub.s32 1, %s4
  %s7 = scalar_select 0, %s6, %s4
  // Predicated region
  $region2: #{_lambda_.12} parent=0 // pred_check
    _
  $region3: #{_lambda_.12} parent=0 // pred_check_branch
    %9 = sbr.rel (0) target = $region5
  $region4: #{_lambda_.12} parent=0 // pred_region
    _
  $region5: #{_lambda_.12} parent=0 // pred_fallthru
    _
  // Predicated region
  $region6: #{_lambda_.12} parent=0 // pred_check
    _
  $region7: #{_lambda_.12} parent=0 // pred_check_branch
    %11 = sbr.rel (0) target = $region9
  $region8: #{_lambda_.12} parent=0 // pred_region
    _
  $region9: #{_lambda_.12} parent=0 // pred_fallthru
    _
  // Predicated region
  $region10: #{_lambda_.12} parent=0 // pred_check
    _
  $region11: #{_lambda_.12} parent=0 // pred_check_branch
    %13 = sbr.rel (0) target = $region13
  $region12: #{_lambda_.12} parent=0 // pred_region
    _
  $region13: #{_lambda_.12} parent=0 // pred_fallthru
    _
  %p15 = scmp.eq.s32.totalorder 0, 0
  // Predicated region
  $region14: #{_lambda_.12} parent=0 // pred_check
    %p16 = pneg %p15
  $region15: #{_lambda_.12} parent=0 // pred_check_branch
    %18 = sbr.rel (%p16) target = $region17
  $region16: #{_lambda_.12} parent=0 // pred_region
    %vm19 = vcmask 261120
    %20 = vst.msk [vmem:[#allocation2] sm:$0xff] %vm19, 0.0
    %21 = vst.msk [vmem:[#allocation2 + $0x8] sm:$0xff] %vm19, 0.0
  $region17: #{_lambda_.12} parent=0 // pred_fallthru
    _
  %v22 = vld [vmem:[#allocation2] sm:$0xff]
  %v23 = vld [vmem:[#allocation2 + $0x8] sm:$0xff]
  %v24 = vld [vmem:[%s0] sm:$0xff]
  %v25 = vld [vmem:[%s0 + $0x8] sm:$0xff]
  %v26 = vld [vmem:[%s1] sm:$0xf]
  %v27 = vld [vmem:[%s1 + $0x4] sm:$0xf]
  %v28 = vld [vmem:[%s1 + $0x8] sm:$0xf]
  %v29 = vld [vmem:[%s1 + $0xc] sm:$0xf]
  %v30 = vld [vmem:[%s1 + $0x10] sm:$0xf]
  %v31 = vld [vmem:[%s1 + $0x14] sm:$0xf]
  %v32 = vld [vmem:[%s1 + $0x18] sm:$0xf]
  %v33 = vld [vmem:[%s1 + $0x1c] sm:$0xf]
  %v34 = vld [vmem:[%s1 + $0x20] sm:$0xf]
  %v35 = vld [vmem:[%s1 + $0x24] sm:$0xf]
  %v36 = vld [vmem:[%s1 + $0x28] sm:$0xf]
  %v37 = vld [vmem:[%s1 + $0x2c] sm:$0xf]
  %v38 = vld [vmem:[%s1 + $0x30] sm:$0xf]
  %v39 = vld [vmem:[%s1 + $0x34] sm:$0xf]
  %v40 = vld [vmem:[%s1 + $0x38] sm:$0xf]
  %v41 = vld [vmem:[%s1 + $0x3c] sm:$0xf]
  %v42 = vld [vmem:[%s1 + $0x40] sm:$0xf]
  %v43 = vld [vmem:[%s1 + $0x44] sm:$0xf]
  %v44 = vld [vmem:[%s1 + $0x48] sm:$0xf]
  %v45 = vld [vmem:[%s1 + $0x4c] sm:$0xf]
  %v46 = vld [vmem:[%s1 + $0x50] sm:$0xf]
  %v47 = vld [vmem:[%s1 + $0x54] sm:$0xf]
  %v48 = vld [vmem:[%s1 + $0x58] sm:$0xf]
  %v49 = vld [vmem:[%s1 + $0x5c] sm:$0xf]
  %v50 = vld [vmem:[%s1 + $0x60] sm:$0xf]
  %v51 = vld [vmem:[%s1 + $0x64] sm:$0xf]
  %v52 = vld [vmem:[%s1 + $0x68] sm:$0xf]
  %v53 = vld [vmem:[%s1 + $0x6c] sm:$0xf]
  %v54 = vld [vmem:[%s1 + $0x70] sm:$0xf]
  %v55 = vld [vmem:[%s1 + $0x74] sm:$0xf]
  %v56 = vld [vmem:[%s1 + $0x78] sm:$0xf]
  %v57 = vld [vmem:[%s1 + $0x7c] sm:$0xf]
  %v60 = vunpack.c.l.b16 %v24
  %v61 = vunpack.c.h.b16 %v24
  %v62 = vunpack.c.l.b16 %v25
  %v63 = vunpack.c.h.b16 %v25
  %v64 = vpack.c.b16 %v62, %v60
  %v65 = vpack.c.b16 %v63, %v61
  %v100 = vunpack.c.l.b16 %v26
  %v101 = vunpack.c.l.b16 %v27
  %v102 = vunpack.c.l.b16 %v28
  %v103 = vunpack.c.l.b16 %v29
  %v104 = vunpack.c.l.b16 %v30
  %v105 = vunpack.c.l.b16 %v31
  %v106 = vunpack.c.l.b16 %v32
  %v107 = vunpack.c.l.b16 %v33
  %v108 = vunpack.c.l.b16 %v34
  %v109 = vunpack.c.l.b16 %v35
  %v110 = vunpack.c.l.b16 %v36
  %v111 = vunpack.c.l.b16 %v37
  %v112 = vunpack.c.l.b16 %v38
  %v113 = vunpack.c.l.b16 %v39
  %v114 = vunpack.c.l.b16 %v40
  %v115 = vunpack.c.l.b16 %v41
  %v116 = vunpack.c.l.b16 %v42
  %v117 = vunpack.c.l.b16 %v43
  %v118 = vunpack.c.l.b16 %v44
  %v119 = vunpack.c.l.b16 %v45
  %v120 = vunpack.c.l.b16 %v46
  %v121 = vunpack.c.l.b16 %v47
  %v122 = vunpack.c.l.b16 %v48
  %v123 = vunpack.c.l.b16 %v49
  %v124 = vunpack.c.l.b16 %v50
  %v125 = vunpack.c.l.b16 %v51
  %v126 = vunpack.c.l.b16 %v52
  %v127 = vunpack.c.l.b16 %v53
  %v128 = vunpack.c.l.b16 %v54
  %v129 = vunpack.c.l.b16 %v55
  %v130 = vunpack.c.l.b16 %v56
  %v131 = vunpack.c.l.b16 %v57
  %v132 = vpack.c.b16 %v101, %v100
  %v133 = vpack.c.b16 %v103, %v102
  %v134 = vpack.c.b16 %v105, %v104
  %v135 = vpack.c.b16 %v107, %v106
  %v136 = vpack.c.b16 %v109, %v108
  %v137 = vpack.c.b16 %v111, %v110
  %v138 = vpack.c.b16 %v113, %v112
  %v139 = vpack.c.b16 %v115, %v114
  %v140 = vpack.c.b16 %v117, %v116
  %v141 = vpack.c.b16 %v119, %v118
  %v142 = vpack.c.b16 %v121, %v120
  %v143 = vpack.c.b16 %v123, %v122
  %v144 = vpack.c.b16 %v125, %v124
  %v145 = vpack.c.b16 %v127, %v126
  %v146 = vpack.c.b16 %v129, %v128
  %v147 = vpack.c.b16 %v131, %v130
  %164 = vmatprep.subr.bf16.mxu0 0
  %165 = vmatpush1.bf16.msra.mxu0 %v139
  %166 = vmatprep.subr.bf16.mxu0 0
  %167 = vmatpush1.bf16.msra.mxu0 %v138
  %168 = vmatprep.subr.bf16.mxu0 0
  %169 = vmatpush1.bf16.msra.mxu0 %v137
  %170 = vmatprep.subr.bf16.mxu0 0
  %171 = vmatpush1.bf16.msra.mxu0 %v136
  %172 = vmatprep.subr.bf16.mxu0 0
  %173 = vmatpush1.bf16.msra.mxu0 %v135
  %174 = vmatprep.subr.bf16.mxu0 0
  %175 = vmatpush1.bf16.msra.mxu0 %v134
  %176 = vmatprep.subr.bf16.mxu0 0
  %177 = vmatpush1.bf16.msra.mxu0 %v133
  %178 = vmatprep.subr.bf16.mxu0 0
  %179 = vmatpush1.bf16.msra.mxu0 %v132
  %180 = vmatprep.subr.bf16.mxu0 0
  %181 = vmatpush2.bf16.msra.mxu0 %v147
  %182 = vmatprep.subr.bf16.mxu0 0
  %183 = vmatpush2.bf16.msra.mxu0 %v146
  %184 = vmatprep.subr.bf16.mxu0 0
  %185 = vmatpush2.bf16.msra.mxu0 %v145
  %186 = vmatprep.subr.bf16.mxu0 0
  %187 = vmatpush2.bf16.msra.mxu0 %v144
  %188 = vmatprep.subr.bf16.mxu0 0
  %189 = vmatpush2.bf16.msra.mxu0 %v143
  %190 = vmatprep.subr.bf16.mxu0 0
  %191 = vmatpush2.bf16.msra.mxu0 %v142
  %192 = vmatprep.subr.bf16.mxu0 0
  %193 = vmatpush2.bf16.msra.mxu0 %v141
  %194 = vmatprep.subr.bf16.mxu0 0
  %195 = vmatpush2.bf16.msra.mxu0 %v140
  %196 = vmatprep.mubr.bf16.mxu0 %v65
  %197 = vmatmul.mubr.bf16.gmra.mxu0 %v64
  %v198 = vpop.f32.mrf.mxu0
  %v199 = vadd.f32 0.0, %v198
  %v200 = vpop.f32.mrf.mxu0
  %v201 = vpop.f32.mrf.mxu0
  %v202 = vadd.f32 0.0, %v201
  %v203 = vpop.f32.mrf.mxu0
  %204 = vdwg.mxu0
  %v205 = vadd.f32 %v22, %v199
  %v206 = vadd.f32 %v23, %v202
  %vm207 = vcmask 261120
  %208 = vst.msk [vmem:[#allocation2] sm:$0xff] %vm207, %v205
  %209 = vst.msk [vmem:[#allocation2 + $0x8] sm:$0xff] %vm207, %v206
  // Predicated region
  $region18: #{_lambda_.12} parent=0 // pred_check
    %p210 = pneg %p15
  $region19: #{_lambda_.12} parent=0 // pred_check_branch
    %212 = sbr.rel (%p210) target = $region21
  $region20: #{_lambda_.12} parent=0 // pred_region
    %v213 = vld [vmem:[#allocation2] sm:$0xff]
    %v214 = vld [vmem:[#allocation2 + $0x8] sm:$0xff]
    %v215 = vld [vmem:[%s2] sm:$0x1]
    %v217 = vlaneseq
    %v218 = vshrl.u32 %v217, 7
    %v219 = vsub.s32 0, %v218
    %v220 = vrot.slane %v215, %v219
    %v222 = vadd.f32 %v213, %v220
    %v223 = vadd.f32 %v214, %v220
    %224 = vst.msk [vmem:[%s3] sm:$0xff] %vm207, %v222
    %225 = vst.msk [vmem:[%s3 + $0x8] sm:$0xff] %vm207, %v223
  $region21: #{_lambda_.12} parent=0 // pred_fallthru
    _
  // Predicated region
  $region22: #{_lambda_.12} parent=0 // pred_check
    _
  $region23: #{_lambda_.12} parent=0 // pred_check_branch
    %227 = sbr.rel (0) target = $region25
  $region24: #{_lambda_.12} parent=0 // pred_region
    _
  $region25: #{_lambda_.12} parent=0 // pred_fallthru
    _
  // Predicated region
  $region26: #{_lambda_.12} parent=0 // pred_check
    _
  $region27: #{_lambda_.12} parent=0 // pred_check_branch
    %229 = sbr.rel (0) target = $region29
  $region28: #{_lambda_.12} parent=0 // pred_region
    _
  $region29: #{_lambda_.12} parent=0 // pred_fallthru
    _

// kernel: _lambda_.15
$region0: #{_lambda_.15}
  #allocation0 [shape = 'u32[]', space=smem, size = 0x4, offset = 0x4, fixed_abs, tag = 'smem constant byte address 0x4 - core index']
  #allocation1 [shape = 'u32[144,128]{1,0:T(1,128)}', space=vmem, size = 0x12000, scoped, tag = 'internal scratch']
  %s0 = inlined_call_operand.vmem [shape: bf16[2,5,96], index: 0, kind: input, shape index: {}]
  %s1 = inlined_call_operand.vmem [shape: bf16[2,5,32], index: 1, kind: output, shape index: {}]
  %s2 = sld [smem:[#allocation0]]
  $region37: #{_lambda_.15} parent=0
    _
  %s4 = ssub.s32 1, %s2
  %s5 = scalar_select 0, %s4, %s2
  loop: start=0, step=1, limit=4
  $region2: #{_lambda_.15} parent=0 // loop_pre_header
    _
  $region3: #{_lambda_.15} parent=0 // loop_header
    %s7 = sphi 0, %s11
    %p8 = scmp.ge.s32.totalorder %s7, 4
    %s14 = sphi 0, %s26
    %s15 = sphi 0, %s22
    %s16 = sphi 0, %s14
    %s17 = sphi 0, %s15
    %s18 = sphi 0, %s16
    %s19 = sphi 0, %s17
    %s31 = sphi 0, %s33
    %s34 = sphi 0, %s31
    %s35 = sphi 0, %s34
    %s51 = sphi 0, %s35
    %s59 = sphi 0, %s61
    %s62 = sphi 0, %s59
    %s63 = sphi 0, %s62
    %s79 = sphi 0, %s63
  $region4: #{_lambda_.15} parent=0 // loop_header_branch
    %10 = sbr.rel (%p8) target = $region8
  $region5: #{_lambda_.15} parent=0 // loop_body
    %s12 = ssub.s32 %s7, 1
    %s13 = ssub.s32 %s7, 2
    %s20 = sadd.s32 1, %s15
    %p21 = scmp.ge.s32.totalorder %s20, 1
    %s22 = scalar_select %p21, 0, %s20
    %s23 = sadd.s32 1, %s14
    %s24 = scalar_select %p21, %s23, %s14
    %p25 = scmp.ge.s32.totalorder %s24, 2
    %s26 = scalar_select %p25, 0, %s24
    %s27 = ssub.s32 %s14, %s26
    %s28 = ssub.s32 %s15, %s22
    %s29 = sor.u32 %s27, %s28
    %p30 = scmp.eq.s32.totalorder %s29, 0
    %s32 = sadd.s32 %s31, 1
    %s33 = scalar_select %p30, %s31, %s32
    %p36 = pneg %p30
    %p37 = scmp.eq.s32.totalorder %s7, 1
    %p38 = por %p36, %p37
    %p39 = scmp.ne.s32.totalorder %s31, %s34
    %p40 = scmp.eq.s32.totalorder %s7, 0
    %p41 = por %p39, %p40
    %p42 = scmp.ne.s32.totalorder %s31, %s34
    %p43 = scmp.eq.s32.totalorder %s12, 1
    %p44 = por %p42, %p43
    %p45 = scmp.ne.s32.totalorder %s34, %s35
    %p46 = scmp.eq.s32.totalorder %s12, 0
    %p47 = por %p45, %p46
    %p48 = scmp.ne.s32.totalorder %s34, %s35
    %p49 = scmp.eq.s32.totalorder %s13, 1
    %p50 = por %p48, %p49
    %p52 = scmp.ne.s32.totalorder %s35, %s51
    %p53 = scmp.eq.s32.totalorder %s13, 0
    %p54 = por %p52, %p53
    %s55 = ssub.s32 %s14, %s26
    %s56 = ssub.s32 %s15, %s22
    %s57 = sor.u32 %s55, %s56
    %p58 = scmp.eq.s32.totalorder %s57, 0
    %s60 = sadd.s32 %s59, 1
    %s61 = scalar_select %p58, %s59, %s60
    %p64 = pneg %p58
    %p65 = scmp.eq.s32.totalorder %s7, 1
    %p66 = por %p64, %p65
    %p67 = scmp.ne.s32.totalorder %s59, %s62
    %p68 = scmp.eq.s32.totalorder %s7, 0
    %p69 = por %p67, %p68
    %p70 = scmp.ne.s32.totalorder %s59, %s62
    %p71 = scmp.eq.s32.totalorder %s12, 1
    %p72 = por %p70, %p71
    %p73 = scmp.ne.s32.totalorder %s62, %s63
    %p74 = scmp.eq.s32.totalorder %s12, 0
    %p75 = por %p73, %p74
    %p76 = scmp.ne.s32.totalorder %s62, %s63
    %p77 = scmp.eq.s32.totalorder %s13, 1
    %p78 = por %p76, %p77
    %p80 = scmp.ne.s32.totalorder %s63, %s79
    %p81 = scmp.eq.s32.totalorder %s13, 0
    %p82 = por %p80, %p81
    %p83 = scmp.le.s32.totalorder 1, %s7
    %p84 = scmp.lt.s32.totalorder %s7, 3
    %p85 = pnand %p83, %p84
    %p86 = pneg %p85
    // Predicated region
    $region9: #{_lambda_.15} parent=5 // pred_check
      _
    $region10: #{_lambda_.15} parent=5 // pred_check_branch
      %88 = sbr.rel (%p85) target = $region12
    $region11: #{_lambda_.15} parent=5 // pred_region
      %s89 = ssub.s32 %s7, 1
    $region12: #{_lambda_.15} parent=5 // pred_fallthru
      _
    %p90 = scmp.lt.s32.totalorder %s7, 2
    // Predicated region
    $region13: #{_lambda_.15} parent=5 // pred_check
      %p91 = pneg %p90
    $region14: #{_lambda_.15} parent=5 // pred_check_branch
      %93 = sbr.rel (%p91) target = $region16
    $region15: #{_lambda_.15} parent=5 // pred_region
      // Predicated region
      $region17: #{_lambda_.15} parent=15 // pred_check
        %p94 = pneg %p41
      $region18: #{_lambda_.15} parent=15 // pred_check_branch
        %96 = sbr.rel (%p94) target = $region20
      $region19: #{_lambda_.15} parent=15 // pred_region
        %p97 = scmp.lt.s32.totalorder %s14, 1
        %s98 = scalar_select %p97, %s14, 1
        %p99 = scmp.lt.s32.totalorder %s15, 0
        %s100 = scalar_select %p99, %s15, 0
        %s101 = sadd.s32 %s100, %s98
        %s102 = smul.addr %s101, 4
        %s103 = scalar_lea.vmem %s0, %s102
      $region20: #{_lambda_.15} parent=15 // pred_fallthru
        _
    $region16: #{_lambda_.15} parent=5 // pred_fallthru
      _
    %p104 = scmp.le.s32.totalorder 1, %s7
    %p105 = scmp.lt.s32.totalorder %s7, 3
    %p106 = pnand %p104, %p105
    %p107 = pneg %p106
    // Predicated region
    $region21: #{_lambda_.15} parent=5 // pred_check
      _
    $region22: #{_lambda_.15} parent=5 // pred_check_branch
      %109 = sbr.rel (%p106) target = $region24
    $region23: #{_lambda_.15} parent=5 // pred_region
      %s110 = ssub.s32 %s7, 1
      %p111 = scmp.lt.s32.totalorder %s16, 1
      %s112 = scalar_select %p111, %s16, 1
      %p113 = scmp.lt.s32.totalorder %s17, 0
      %s114 = scalar_select %p113, %s17, 0
      %s115 = sadd.s32 %s114, %s112
      %s116 = smul.addr %s115, 4
      %s117 = scalar_lea.vmem %s0, %s116
      %p118 = pneg %p47
      %p119 = pneg %p44
      %p120 = pneg %p75
      %p121 = pneg %p72
      %p122 = scmp.lt.s32.totalorder %s16, 1
      %s123 = scalar_select %p122, %s16, 1
      %p124 = scmp.lt.s32.totalorder %s17, 0
      %s125 = scalar_select %p124, %s17, 0
      %s126 = sadd.s32 %s125, %s123
      %s127 = smul.addr %s126, 4
      %s128 = scalar_lea.vmem %s1, %s127
      %p129 = scmp.lt.s32.totalorder %s16, 1
      %s130 = scalar_select %p129, %s16, 1
      %p131 = scmp.lt.s32.totalorder %s17, 0
      %s132 = scalar_select %p131, %s17, 0
      %s133 = sadd.s32 %s132, %s130
      %s134 = smul.addr %s133, 4
      %s135 = scalar_lea.vmem %s0, %s134
      %p136 = scmp.lt.s32.totalorder %s16, 1
      %s137 = scalar_select %p136, %s16, 1
      %p138 = scmp.lt.s32.totalorder %s17, 0
      %s139 = scalar_select %p138, %s17, 0
      %s140 = sadd.s32 %s139, %s137
      %s141 = smul.addr %s140, 4
      %s142 = scalar_lea.vmem %s1, %s141
      %v144 = vld [vmem:[%s135] sm:$0x7]
      %v146 = vunpack.c.l.b16 %v144
      %v147 = vpack.c.b16 %v146, %v146
      %148 = vrot.lane.b32.xlu0 %v147, 96
      %v149 = vpop.permute.xlu0 %148
      %vm150 = vcmask 64512
      %v152 = vsel %vm150, %v144, 0
      %v155 = vsel %vm150, %v149, 0
      %157 = vmatprep.subr.bf16.mxu0 0
      %158 = vmatpush1.bf16.xpose.msra.mxu0 0
      %159 = vmatprep.subr.bf16.mxu0 0
      %160 = vmatpush1.bf16.xpose.msra.mxu0 0
      %161 = vmatprep.subr.bf16.mxu0 0
      %162 = vmatpush1.bf16.xpose.msra.mxu0 0
      %163 = vmatprep.subr.bf16.mxu0 0
      %164 = vmatpush1.bf16.xpose.msra.mxu0 0
      %165 = vmatprep.subr.bf16.mxu0 0
      %166 = vmatpush1.bf16.xpose.msra.mxu0 0
      %167 = vmatprep.subr.bf16.mxu0 0
      %168 = vmatpush1.bf16.xpose.msra.mxu0 0
      %169 = vmatprep.subr.bf16.mxu0 0
      %170 = vmatpush1.bf16.xpose.msra.mxu0 0
      %171 = vmatprep.subr.bf16.mxu0 0
      %172 = vmatpush1.bf16.xpose.msra.mxu0 %v155
      %173 = vmatprep.subr.bf16.mxu0 0
      %174 = vmatpush2.bf16.xpose.msra.mxu0 0
      %175 = vmatprep.subr.bf16.mxu0 0
      %176 = vmatpush2.bf16.xpose.msra.mxu0 0
      %177 = vmatprep.subr.bf16.mxu0 0
      %178 = vmatpush2.bf16.xpose.msra.mxu0 0
      %179 = vmatprep.subr.bf16.mxu0 0
      %180 = vmatpush2.bf16.xpose.msra.mxu0 0
      %181 = vmatprep.subr.bf16.mxu0 0
      %182 = vmatpush2.bf16.xpose.msra.mxu0 0
      %183 = vmatprep.subr.bf16.mxu0 0
      %184 = vmatpush2.bf16.xpose.msra.mxu0 0
      %185 = vmatprep.subr.bf16.mxu0 0
      %186 = vmatpush2.bf16.xpose.msra.mxu0 0
      %187 = vmatprep.subr.bf16.mxu0 0
      %188 = vmatpush2.bf16.xpose.msra.mxu0 0
      %189 = vmatprep.mubr.bf16.mxu0 0
      %190 = vmatmul.mubr.bf16.gmra.mxu0 %v152
      %v191 = vpop.f32.mrf.mxu0
      %v192 = vadd.f32 0.0, %v191
      %v193 = vpop.f32.mrf.mxu0
      %v194 = vpop.f32.mrf.mxu0
      %v195 = vpop.f32.mrf.mxu0
      %196 = vdwg.mxu0
      %v197 = vmul.f32 %v192, 0.35355338
      %vm198 = vcmask 36864
      %v199 = vsel %vm198, %v197, -inf
      %200 = vmax.xlane.f32.xlu0 %v199
      %v201 = vpop.xlane.xlu0 %200
      %v202 = vsub.f32 %v197, %v201
      %v203 = vmul.f32 %v202, 1.442695
      %v204 = vpow.pop %v203
      %v205 = vsel %vm198, %v204, 0.0
      %206 = vadd.xlane.f32.xlu0 %v205
      %v207 = vpop.xlane.xlu0 %206
      %v208 = vrcp.pop %v207
      %v209 = vmul.f32 %v204, %v208
      %v210 = vpack.c.bf16 %v209, %v209
      %211 = vrot.lane.b32.xlu0 %v147, 64
      %v212 = vpop.permute.xlu0 %211
      %vm213 = vcmask 39936
      %v215 = vsel %vm213, %v210, 0
      %vm217 = vcmask 1041408
      %vm218 = vcmask 1042432
      %v219 = vsel %vm217, 4294967295, 65535
      %v220 = vsel %vm218, %v219, 0
      %v222 = vand.u32 %v212, %v220
      %224 = vmatprep.subr.bf16.mxu0 0
      %225 = vmatpush1.bf16.msra.mxu0 0
      %226 = vmatprep.subr.bf16.mxu0 0
      %227 = vmatpush1.bf16.msra.mxu0 0
      %228 = vmatprep.subr.bf16.mxu0 0
      %229 = vmatpush1.bf16.msra.mxu0 0
      %230 = vmatprep.subr.bf16.mxu0 0
      %231 = vmatpush1.bf16.msra.mxu0 0
      %232 = vmatprep.subr.bf16.mxu0 0
      %233 = vmatpush1.bf16.msra.mxu0 0
      %234 = vmatprep.subr.bf16.mxu0 0
      %235 = vmatpush1.bf16.msra.mxu0 0
      %236 = vmatprep.subr.bf16.mxu0 0
      %237 = vmatpush1.bf16.msra.mxu0 0
      %238 = vmatprep.subr.bf16.mxu0 0
      %239 = vmatpush1.bf16.msra.mxu0 %v222
      %240 = vmatprep.subr.bf16.mxu0 0
      %241 = vmatpush2.bf16.msra.mxu0 0
      %242 = vmatprep.subr.bf16.mxu0 0
      %243 = vmatpush2.bf16.msra.mxu0 0
      %244 = vmatprep.subr.bf16.mxu0 0
      %245 = vmatpush2.bf16.msra.mxu0 0
      %246 = vmatprep.subr.bf16.mxu0 0
      %247 = vmatpush2.bf16.msra.mxu0 0
      %248 = vmatprep.subr.bf16.mxu0 0
      %249 = vmatpush2.bf16.msra.mxu0 0
      %250 = vmatprep.subr.bf16.mxu0 0
      %251 = vmatpush2.bf16.msra.mxu0 0
      %252 = vmatprep.subr.bf16.mxu0 0
      %253 = vmatpush2.bf16.msra.mxu0 0
      %254 = vmatprep.subr.bf16.mxu0 0
      %255 = vmatpush2.bf16.msra.mxu0 0
      %256 = vmatprep.mubr.bf16.mxu0 0
      %257 = vmatmul.mubr.bf16.gmra.mxu0 %v215
      %v258 = vpop.f32.mrf.mxu0
      %v259 = vadd.f32 0.0, %v258
      %v260 = vpop.f32.mrf.mxu0
      %v261 = vpop.f32.mrf.mxu0
      %v262 = vpop.f32.mrf.mxu0
      %263 = vdwg.mxu0
      %264 = vrot.lane.b32.xlu0 %v147, 120
      %v265 = vpop.permute.xlu0 %264
      %266 = vrot.lane.b32.xlu0 %v147, 88
      %v267 = vpop.permute.xlu0 %266
      %v269 = vsel %vm150, %v265, 0
      %v272 = vsel %vm150, %v267, 0
      %274 = vmatprep.subr.bf16.mxu0 0
      %275 = vmatpush1.bf16.xpose.msra.mxu0 0
      %276 = vmatprep.subr.bf16.mxu0 0
      %277 = vmatpush1.bf16.xpose.msra.mxu0 0
      %278 = vmatprep.subr.bf16.mxu0 0
      %279 = vmatpush1.bf16.xpose.msra.mxu0 0
      %280 = vmatprep.subr.bf16.mxu0 0
      %281 = vmatpush1.bf16.xpose.msra.mxu0 0
      %282 = vmatprep.subr.bf16.mxu0 0
      %283 = vmatpush1.bf16.xpose.msra.mxu0 0
      %284 = vmatprep.subr.bf16.mxu0 0
      %285 = vmatpush1.bf16.xpose.msra.mxu0 0
      %286 = vmatprep.subr.bf16.mxu0 0
      %287 = vmatpush1.bf16.xpose.msra.mxu0 0
      %288 = vmatprep.subr.bf16.mxu0 0
      %289 = vmatpush1.bf16.xpose.msra.mxu0 %v272
      %290 = vmatprep.subr.bf16.mxu0 0
      %291 = vmatpush2.bf16.xpose.msra.mxu0 0
      %292 = vmatprep.subr.bf16.mxu0 0
      %293 = vmatpush2.bf16.xpose.msra.mxu0 0
      %294 = vmatprep.subr.bf16.mxu0 0
      %295 = vmatpush2.bf16.xpose.msra.mxu0 0
      %296 = vmatprep.subr.bf16.mxu0 0
      %297 = vmatpush2.bf16.xpose.msra.mxu0 0
      %298 = vmatprep.subr.bf16.mxu0 0
      %299 = vmatpush2.bf16.xpose.msra.mxu0 0
      %300 = vmatprep.subr.bf16.mxu0 0
      %301 = vmatpush2.bf16.xpose.msra.mxu0 0
      %302 = vmatprep.subr.bf16.mxu0 0
      %303 = vmatpush2.bf16.xpose.msra.mxu0 0
      %304 = vmatprep.subr.bf16.mxu0 0
      %305 = vmatpush2.bf16.xpose.msra.mxu0 0
      %306 = vmatprep.mubr.bf16.mxu0 0
      %307 = vmatmul.mubr.bf16.gmra.mxu0 %v269
      %v308 = vpop.f32.mrf.mxu0
      %v309 = vadd.f32 0.0, %v308
      %v310 = vpop.f32.mrf.mxu0
      %v311 = vpop.f32.mrf.mxu0
      %v312 = vpop.f32.mrf.mxu0
      %313 = vdwg.mxu0
      %v314 = vmul.f32 %v309, 0.35355338
      %v315 = vsel %vm198, %v314, -inf
      %316 = vmax.xlane.f32.xlu0 %v315
      %v317 = vpop.xlane.xlu0 %316
      %v318 = vsub.f32 %v314, %v317
      %v319 = vmul.f32 %v318, 1.442695
      %v320 = vpow.pop %v319
      %v321 = vsel %vm198, %v320, 0.0
      %322 = vadd.xlane.f32.xlu0 %v321
      %v323 = vpop.xlane.xlu0 %322
      %v324 = vrcp.pop %v323
      %v325 = vmul.f32 %v320, %v324
      %v326 = vpack.c.bf16 %v325, %v325
      %327 = vrot.lane.b32.xlu0 %v147, 56
      %v328 = vpop.permute.xlu0 %327
      %v330 = vsel %vm213, %v326, 0
      %v333 = vand.u32 %v328, %v220
      %335 = vmatprep.subr.bf16.mxu0 0
      %336 = vmatpush1.bf16.msra.mxu0 0
      %337 = vmatprep.subr.bf16.mxu0 0
      %338 = vmatpush1.bf16.msra.mxu0 0
      %339 = vmatprep.subr.bf16.mxu0 0
      %340 = vmatpush1.bf16.msra.mxu0 0
      %341 = vmatprep.subr.bf16.mxu0 0
      %342 = vmatpush1.bf16.msra.mxu0 0
      %343 = vmatprep.subr.bf16.mxu0 0
      %344 = vmatpush1.bf16.msra.mxu0 0
      %345 = vmatprep.subr.bf16.mxu0 0
      %346 = vmatpush1.bf16.msra.mxu0 0
      %347 = vmatprep.subr.bf16.mxu0 0
      %348 = vmatpush1.bf16.msra.mxu0 0
      %349 = vmatprep.subr.bf16.mxu0 0
      %350 = vmatpush1.bf16.msra.mxu0 %v333
      %351 = vmatprep.subr.bf16.mxu0 0
      %352 = vmatpush2.bf16.msra.mxu0 0
      %353 = vmatprep.subr.bf16.mxu0 0
      %354 = vmatpush2.bf16.msra.mxu0 0
      %355 = vmatprep.subr.bf16.mxu0 0
      %356 = vmatpush2.bf16.msra.mxu0 0
      %357 = vmatprep.subr.bf16.mxu0 0
      %358 = vmatpush2.bf16.msra.mxu0 0
      %359 = vmatprep.subr.bf16.mxu0 0
      %360 = vmatpush2.bf16.msra.mxu0 0
      %361 = vmatprep.subr.bf16.mxu0 0
      %362 = vmatpush2.bf16.msra.mxu0 0
      %363 = vmatprep.subr.bf16.mxu0 0
      %364 = vmatpush2.bf16.msra.mxu0 0
      %365 = vmatprep.subr.bf16.mxu0 0
      %366 = vmatpush2.bf16.msra.mxu0 0
      %367 = vmatprep.mubr.bf16.mxu0 0
      %368 = vmatmul.mubr.bf16.gmra.mxu0 %v330
      %v369 = vpop.f32.mrf.mxu0
      %v370 = vadd.f32 0.0, %v369
      %v371 = vpop.f32.mrf.mxu0
      %v372 = vpop.f32.mrf.mxu0
      %v373 = vpop.f32.mrf.mxu0
      %374 = vdwg.mxu0
      %375 = vrot.lane.b32.xlu0 %v147, 112
      %v376 = vpop.permute.xlu0 %375
      %377 = vrot.lane.b32.xlu0 %v147, 80
      %v378 = vpop.permute.xlu0 %377
      %v380 = vsel %vm150, %v376, 0
      %v383 = vsel %vm150, %v378, 0
      %385 = vmatprep.subr.bf16.mxu0 0
      %386 = vmatpush1.bf16.xpose.msra.mxu0 0
      %387 = vmatprep.subr.bf16.mxu0 0
      %388 = vmatpush1.bf16.xpose.msra.mxu0 0
      %389 = vmatprep.subr.bf16.mxu0 0
      %390 = vmatpush1.bf16.xpose.msra.mxu0 0
      %391 = vmatprep.subr.bf16.mxu0 0
      %392 = vmatpush1.bf16.xpose.msra.mxu0 0
      %393 = vmatprep.subr.bf16.mxu0 0
      %394 = vmatpush1.bf16.xpose.msra.mxu0 0
      %395 = vmatprep.subr.bf16.mxu0 0
      %396 = vmatpush1.bf16.xpose.msra.mxu0 0
      %397 = vmatprep.subr.bf16.mxu0 0
      %398 = vmatpush1.bf16.xpose.msra.mxu0 0
      %399 = vmatprep.subr.bf16.mxu0 0
      %400 = vmatpush1.bf16.xpose.msra.mxu0 %v383
      %401 = vmatprep.subr.bf16.mxu0 0
      %402 = vmatpush2.bf16.xpose.msra.mxu0 0
      %403 = vmatprep.subr.bf16.mxu0 0
      %404 = vmatpush2.bf16.xpose.msra.mxu0 0
      %405 = vmatprep.subr.bf16.mxu0 0
      %406 = vmatpush2.bf16.xpose.msra.mxu0 0
      %407 = vmatprep.subr.bf16.mxu0 0
      %408 = vmatpush2.bf16.xpose.msra.mxu0 0
      %409 = vmatprep.subr.bf16.mxu0 0
      %410 = vmatpush2.bf16.xpose.msra.mxu0 0
      %411 = vmatprep.subr.bf16.mxu0 0
      %412 = vmatpush2.bf16.xpose.msra.mxu0 0
      %413 = vmatprep.subr.bf16.mxu0 0
      %414 = vmatpush2.bf16.xpose.msra.mxu0 0
      %415 = vmatprep.subr.bf16.mxu0 0
      %416 = vmatpush2.bf16.xpose.msra.mxu0 0
      %417 = vmatprep.mubr.bf16.mxu0 0
      %418 = vmatmul.mubr.bf16.gmra.mxu0 %v380
      %v419 = vpop.f32.mrf.mxu0
      %v420 = vadd.f32 0.0, %v419
      %v421 = vpop.f32.mrf.mxu0
      %v422 = vpop.f32.mrf.mxu0
      %v423 = vpop.f32.mrf.mxu0
      %424 = vdwg.mxu0
      %v425 = vmul.f32 %v420, 0.35355338
      %v426 = vsel %vm198, %v425, -inf
      %427 = vmax.xlane.f32.xlu0 %v426
      %v428 = vpop.xlane.xlu0 %427
      %v429 = vsub.f32 %v425, %v428
      %v430 = vmul.f32 %v429, 1.442695
      %v431 = vpow.pop %v430
      %v432 = vsel %vm198, %v431, 0.0
      %433 = vadd.xlane.f32.xlu0 %v432
      %v434 = vpop.xlane.xlu0 %433
      %v435 = vrcp.pop %v434
      %v436 = vmul.f32 %v431, %v435
      %v437 = vpack.c.bf16 %v436, %v436
      %438 = vrot.lane.b32.xlu0 %v147, 48
      %v439 = vpop.permute.xlu0 %438
      %v441 = vsel %vm213, %v437, 0
      %v444 = vand.u32 %v439, %v220
      %446 = vmatprep.subr.bf16.mxu0 0
      %447 = vmatpush1.bf16.msra.mxu0 0
      %448 = vmatprep.subr.bf16.mxu0 0
      %449 = vmatpush1.bf16.msra.mxu0 0
      %450 = vmatprep.subr.bf16.mxu0 0
      %451 = vmatpush1.bf16.msra.mxu0 0
      %452 = vmatprep.subr.bf16.mxu0 0
      %453 = vmatpush1.bf16.msra.mxu0 0
      %454 = vmatprep.subr.bf16.mxu0 0
      %455 = vmatpush1.bf16.msra.mxu0 0
      %456 = vmatprep.subr.bf16.mxu0 0
      %457 = vmatpush1.bf16.msra.mxu0 0
      %458 = vmatprep.subr.bf16.mxu0 0
      %459 = vmatpush1.bf16.msra.mxu0 0
      %460 = vmatprep.subr.bf16.mxu0 0
      %461 = vmatpush1.bf16.msra.mxu0 %v444
      %462 = vmatprep.subr.bf16.mxu0 0
      %463 = vmatpush2.bf16.msra.mxu0 0
      %464 = vmatprep.subr.bf16.mxu0 0
      %465 = vmatpush2.bf16.msra.mxu0 0
      %466 = vmatprep.subr.bf16.mxu0 0
      %467 = vmatpush2.bf16.msra.mxu0 0
      %468 = vmatprep.subr.bf16.mxu0 0
      %469 = vmatpush2.bf16.msra.mxu0 0
      %470 = vmatprep.subr.bf16.mxu0 0
      %471 = vmatpush2.bf16.msra.mxu0 0
      %472 = vmatprep.subr.bf16.mxu0 0
      %473 = vmatpush2.bf16.msra.mxu0 0
      %474 = vmatprep.subr.bf16.mxu0 0
      %475 = vmatpush2.bf16.msra.mxu0 0
      %476 = vmatprep.subr.bf16.mxu0 0
      %477 = vmatpush2.bf16.msra.mxu0 0
      %478 = vmatprep.mubr.bf16.mxu0 0
      %479 = vmatmul.mubr.bf16.gmra.mxu0 %v441
      %v480 = vpop.f32.mrf.mxu0
      %v481 = vadd.f32 0.0, %v480
      %v482 = vpop.f32.mrf.mxu0
      %v483 = vpop.f32.mrf.mxu0
      %v484 = vpop.f32.mrf.mxu0
      %485 = vdwg.mxu0
      %486 = vrot.lane.b32.xlu0 %v147, 104
      %v487 = vpop.permute.xlu0 %486
      %488 = vrot.lane.b32.xlu0 %v147, 72
      %v489 = vpop.permute.xlu0 %488
      %v491 = vsel %vm150, %v487, 0
      %v494 = vsel %vm150, %v489, 0
      %496 = vmatprep.subr.bf16.mxu0 0
      %497 = vmatpush1.bf16.xpose.msra.mxu0 0
      %498 = vmatprep.subr.bf16.mxu0 0
      %499 = vmatpush1.bf16.xpose.msra.mxu0 0
      %500 = vmatprep.subr.bf16.mxu0 0
      %501 = vmatpush1.bf16.xpose.msra.mxu0 0
      %502 = vmatprep.subr.bf16.mxu0 0
      %503 = vmatpush1.bf16.xpose.msra.mxu0 0
      %504 = vmatprep.subr.bf16.mxu0 0
      %505 = vmatpush1.bf16.xpose.msra.mxu0 0
      %506 = vmatprep.subr.bf16.mxu0 0
      %507 = vmatpush1.bf16.xpose.msra.mxu0 0
      %508 = vmatprep.subr.bf16.mxu0 0
      %509 = vmatpush1.bf16.xpose.msra.mxu0 0
      %510 = vmatprep.subr.bf16.mxu0 0
      %511 = vmatpush1.bf16.xpose.msra.mxu0 %v494
      %512 = vmatprep.subr.bf16.mxu0 0
      %513 = vmatpush2.bf16.xpose.msra.mxu0 0
      %514 = vmatprep.subr.bf16.mxu0 0
      %515 = vmatpush2.bf16.xpose.msra.mxu0 0
      %516 = vmatprep.subr.bf16.mxu0 0
      %517 = vmatpush2.bf16.xpose.msra.mxu0 0
      %518 = vmatprep.subr.bf16.mxu0 0
      %519 = vmatpush2.bf16.xpose.msra.mxu0 0
      %520 = vmatprep.subr.bf16.mxu0 0
      %521 = vmatpush2.bf16.xpose.msra.mxu0 0
      %522 = vmatprep.subr.bf16.mxu0 0
      %523 = vmatpush2.bf16.xpose.msra.mxu0 0
      %524 = vmatprep.subr.bf16.mxu0 0
      %525 = vmatpush2.bf16.xpose.msra.mxu0 0
      %526 = vmatprep.subr.bf16.mxu0 0
      %527 = vmatpush2.bf16.xpose.msra.mxu0 0
      %528 = vmatprep.mubr.bf16.mxu0 0
      %529 = vmatmul.mubr.bf16.gmra.mxu0 %v491
      %v530 = vpop.f32.mrf.mxu0
      %v531 = vadd.f32 0.0, %v530
      %v532 = vpop.f32.mrf.mxu0
      %v533 = vpop.f32.mrf.mxu0
      %v534 = vpop.f32.mrf.mxu0
      %535 = vdwg.mxu0
      %v536 = vmul.f32 %v531, 0.35355338
      %v537 = vsel %vm198, %v536, -inf
      %538 = vmax.xlane.f32.xlu0 %v537
      %v539 = vpop.xlane.xlu0 %538
      %v540 = vsub.f32 %v536, %v539
      %v541 = vmul.f32 %v540, 1.442695
      %v542 = vpow.pop %v541
      %v543 = vsel %vm198, %v542, 0.0
      %544 = vadd.xlane.f32.xlu0 %v543
      %v545 = vpop.xlane.xlu0 %544
      %v546 = vrcp.pop %v545
      %v547 = vmul.f32 %v542, %v546
      %v548 = vpack.c.bf16 %v547, %v547
      %549 = vrot.lane.b32.xlu0 %v147, 40
      %v550 = vpop.permute.xlu0 %549
      %v552 = vsel %vm213, %v548, 0
      %v555 = vand.u32 %v550, %v220
      %557 = vmatprep.subr.bf16.mxu0 0
      %558 = vmatpush1.bf16.msra.mxu0 0
      %559 = vmatprep.subr.bf16.mxu0 0
      %560 = vmatpush1.bf16.msra.mxu0 0
      %561 = vmatprep.subr.bf16.mxu0 0
      %562 = vmatpush1.bf16.msra.mxu0 0
      %563 = vmatprep.subr.bf16.mxu0 0
      %564 = vmatpush1.bf16.msra.mxu0 0
      %565 = vmatprep.subr.bf16.mxu0 0
      %566 = vmatpush1.bf16.msra.mxu0 0
      %567 = vmatprep.subr.bf16.mxu0 0
      %568 = vmatpush1.bf16.msra.mxu0 0
      %569 = vmatprep.subr.bf16.mxu0 0
      %570 = vmatpush1.bf16.msra.mxu0 0
      %571 = vmatprep.subr.bf16.mxu0 0
      %572 = vmatpush1.bf16.msra.mxu0 %v555
      %573 = vmatprep.subr.bf16.mxu0 0
      %574 = vmatpush2.bf16.msra.mxu0 0
      %575 = vmatprep.subr.bf16.mxu0 0
      %576 = vmatpush2.bf16.msra.mxu0 0
      %577 = vmatprep.subr.bf16.mxu0 0
      %578 = vmatpush2.bf16.msra.mxu0 0
      %579 = vmatprep.subr.bf16.mxu0 0
      %580 = vmatpush2.bf16.msra.mxu0 0
      %581 = vmatprep.subr.bf16.mxu0 0
      %582 = vmatpush2.bf16.msra.mxu0 0
      %583 = vmatprep.subr.bf16.mxu0 0
      %584 = vmatpush2.bf16.msra.mxu0 0
      %585 = vmatprep.subr.bf16.mxu0 0
      %586 = vmatpush2.bf16.msra.mxu0 0
      %587 = vmatprep.subr.bf16.mxu0 0
      %588 = vmatpush2.bf16.msra.mxu0 0
      %589 = vmatprep.mubr.bf16.mxu0 0
      %590 = vmatmul.mubr.bf16.gmra.mxu0 %v552
      %v591 = vpop.f32.mrf.mxu0
      %v592 = vadd.f32 0.0, %v591
      %v593 = vpop.f32.mrf.mxu0
      %v594 = vpop.f32.mrf.mxu0
      %v595 = vpop.f32.mrf.mxu0
      %596 = vdwg.mxu0
      %598 = vrot.lane.b32.xlu0 %v370, 8
      %v599 = vpop.permute.xlu0 %598
      %602 = vrot.lane.b32.xlu0 %v481, 16
      %v603 = vpop.permute.xlu0 %602
      %606 = vrot.lane.b32.xlu0 %v592, 24
      %v607 = vpop.permute.xlu0 %606
      %v609 = vsel %vm150, %v259, %v599
      %vm610 = vcmask 130048
      %v611 = vsel %vm610, %v609, %v603
      %vm612 = vcmask 195584
      %v613 = vsel %vm612, %v611, %v607
      %v614 = vpack.c.bf16 %v613, %v613
      %vm615 = vcmask 256000
      %vm616 = vsmask.f32 2304
      %vm617 = vmand %vm615, %vm616
      %v618 = vld [vmem:[%s142] sm:$0x7]
      %v619 = vsel %vm617, %v614, %v618
      %620 = vst [vmem:[%s142] sm:$0x7] %v619
      %p621 = scmp.lt.s32.totalorder %s16, 1
      %s622 = scalar_select %p621, %s16, 1
      %p623 = scmp.lt.s32.totalorder %s17, 0
      %s624 = scalar_select %p623, %s17, 0
      %s625 = sadd.s32 %s624, %s622
      %s626 = smul.addr %s625, 4
      %s627 = scalar_lea.vmem %s1, %s626
      // Predicated region
      $region25: #{_lambda_.15} parent=23 // pred_check
        %p628 = pneg %p72
      $region26: #{_lambda_.15} parent=23 // pred_check_branch
        %630 = sbr.rel (%p628) target = $region28
      $region27: #{_lambda_.15} parent=23 // pred_region
        _
      $region28: #{_lambda_.15} parent=23 // pred_fallthru
        _
    $region24: #{_lambda_.15} parent=5 // pred_fallthru
      _
    %p631 = scmp.le.s32.totalorder 2, %s7
    // Predicated region
    $region29: #{_lambda_.15} parent=5 // pred_check
      %p632 = pneg %p631
    $region30: #{_lambda_.15} parent=5 // pred_check_branch
      %634 = sbr.rel (%p632) target = $region32
    $region31: #{_lambda_.15} parent=5 // pred_region
      %s635 = ssub.s32 %s7, 2
      // Predicated region
      $region33: #{_lambda_.15} parent=31 // pred_check
        %p636 = pneg %p78
      $region34: #{_lambda_.15} parent=31 // pred_check_branch
        %638 = sbr.rel (%p636) target = $region36
      $region35: #{_lambda_.15} parent=31 // pred_region
        %p639 = scmp.lt.s32.totalorder %s18, 1
        %s640 = scalar_select %p639, %s18, 1
        %p641 = scmp.lt.s32.totalorder %s19, 0
        %s642 = scalar_select %p641, %s19, 0
        %s643 = sadd.s32 %s642, %s640
        %s644 = smul.addr %s643, 4
        %s645 = scalar_lea.vmem %s1, %s644
      $region36: #{_lambda_.15} parent=31 // pred_fallthru
        _
    $region32: #{_lambda_.15} parent=5 // pred_fallthru
      _
  $region6: #{_lambda_.15} parent=0 // loop_footer
    %s11 = sadd.s32 1, %s7
  $region7: #{_lambda_.15} parent=0 // loop_footer_branch
    %6 = sbr.rel target = $region3
  $region8: #{_lambda_.15} parent=0 // loop_exit
    _

// kernel: _lambda_.16
$region0: #{_lambda_.16}
  #allocation0 [shape = 'u32[]', space=smem, size = 0x4, offset = 0x4, fixed_abs, tag = 'smem constant byte address 0x4 - core index']
  #allocation1 [shape = 'u32[144,128]{1,0:T(1,128)}', space=vmem, size = 0x12000, scoped, tag = 'internal scratch']
  #allocation2 [shape = 'f32[16,32]{1,0:T(8,128)}', space=vmem, size = 0x2000, scoped, tag = 'scratch operand']
  %s0 = inlined_call_operand.vmem [shape: bf16[16,32], index: 0, kind: input, shape index: {}]
  %s1 = inlined_call_operand.vmem [shape: bf16[32,32], index: 1, kind: input, shape index: {}]
  %s2 = inlined_call_operand.vmem [shape: f32[1,32], index: 2, kind: input, shape index: {}]
  %s3 = inlined_call_operand.vmem [shape: f32[16,32], index: 3, kind: input, shape index: {}]
  %s4 = inlined_call_operand.vmem [shape: f32[16,32], index: 4, kind: output, shape index: {}]
  %s5 = sld [smem:[#allocation0]]
  $region34: #{_lambda_.16} parent=0
    _
  %s7 = ssub.s32 1, %s5
  %s8 = scalar_select 0, %s7, %s5
  // Predicated region
  $region2: #{_lambda_.16} parent=0 // pred_check
    _
  $region3: #{_lambda_.16} parent=0 // pred_check_branch
    %10 = sbr.rel (0) target = $region5
  $region4: #{_lambda_.16} parent=0 // pred_region
    _
  $region5: #{_lambda_.16} parent=0 // pred_fallthru
    _
  // Predicated region
  $region6: #{_lambda_.16} parent=0 // pred_check
    _
  $region7: #{_lambda_.16} parent=0 // pred_check_branch
    %12 = sbr.rel (0) target = $region9
  $region8: #{_lambda_.16} parent=0 // pred_region
    _
  $region9: #{_lambda_.16} parent=0 // pred_fallthru
    _
  // Predicated region
  $region10: #{_lambda_.16} parent=0 // pred_check
    _
  $region11: #{_lambda_.16} parent=0 // pred_check_branch
    %14 = sbr.rel (0) target = $region13
  $region12: #{_lambda_.16} parent=0 // pred_region
    _
  $region13: #{_lambda_.16} parent=0 // pred_fallthru
    _
  // Predicated region
  $region14: #{_lambda_.16} parent=0 // pred_check
    _
  $region15: #{_lambda_.16} parent=0 // pred_check_branch
    %16 = sbr.rel (0) target = $region17
  $region16: #{_lambda_.16} parent=0 // pred_region
    _
  $region17: #{_lambda_.16} parent=0 // pred_fallthru
    _
  %p18 = scmp.eq.s32.totalorder 0, 0
  // Predicated region
  $region18: #{_lambda_.16} parent=0 // pred_check
    %p19 = pneg %p18
  $region19: #{_lambda_.16} parent=0 // pred_check_branch
    %21 = sbr.rel (%p19) target = $region21
  $region20: #{_lambda_.16} parent=0 // pred_region
    %vm22 = vcmask 261120
    %23 = vst.msk [vmem:[#allocation2] sm:$0xff] %vm22, 0.0
    %24 = vst.msk [vmem:[#allocation2 + $0x8] sm:$0xff] %vm22, 0.0
  $region21: #{_lambda_.16} parent=0 // pred_fallthru
    _
  %v25 = vld [vmem:[#allocation2] sm:$0xff]
  %v26 = vld [vmem:[#allocation2 + $0x8] sm:$0xff]
  %v27 = vld [vmem:[%s0] sm:$0xf]
  %v28 = vld [vmem:[%s0 + $0x4] sm:$0xf]
  %v29 = vld [vmem:[%s1] sm:$0xf]
  %v30 = vld [vmem:[%s1 + $0x4] sm:$0xf]
  %v31 = vld [vmem:[%s1 + $0x8] sm:$0xf]
  %v32 = vld [vmem:[%s1 + $0xc] sm:$0xf]
  %v35 = vunpack.c.l.b16 %v27
  %v36 = vunpack.c.l.b16 %v28
  %v37 = vpack.c.b16 %v36, %v35
  %v42 = vunpack.c.l.b16 %v29
  %v43 = vunpack.c.l.b16 %v30
  %v44 = vunpack.c.l.b16 %v31
  %v45 = vunpack.c.l.b16 %v32
  %v46 = vpack.c.b16 %v43, %v42
  %v47 = vpack.c.b16 %v45, %v44
  %vm50 = vcmask 261120
  %v52 = vsel %vm50, %v37, 0
  %54 = vmatprep.subr.bf16.mxu0 0
  %55 = vmatpush1.bf16.msra.mxu0 0
  %56 = vmatprep.subr.bf16.mxu0 0
  %57 = vmatpush1.bf16.msra.mxu0 0
  %58 = vmatprep.subr.bf16.mxu0 0
  %59 = vmatpush1.bf16.msra.mxu0 0
  %60 = vmatprep.subr.bf16.mxu0 0
  %61 = vmatpush1.bf16.msra.mxu0 0
  %62 = vmatprep.subr.bf16.mxu0 0
  %63 = vmatpush1.bf16.msra.mxu0 0
  %64 = vmatprep.subr.bf16.mxu0 0
  %65 = vmatpush1.bf16.msra.mxu0 0
  %66 = vmatprep.subr.bf16.mxu0 0
  %67 = vmatpush1.bf16.msra.mxu0 %v47
  %68 = vmatprep.subr.bf16.mxu0 0
  %69 = vmatpush1.bf16.msra.mxu0 %v46
  %70 = vmatprep.subr.bf16.mxu0 0
  %71 = vmatpush2.bf16.msra.mxu0 0
  %72 = vmatprep.subr.bf16.mxu0 0
  %73 = vmatpush2.bf16.msra.mxu0 0
  %74 = vmatprep.subr.bf16.mxu0 0
  %75 = vmatpush2.bf16.msra.mxu0 0
  %76 = vmatprep.subr.bf16.mxu0 0
  %77 = vmatpush2.bf16.msra.mxu0 0
  %78 = vmatprep.subr.bf16.mxu0 0
  %79 = vmatpush2.bf16.msra.mxu0 0
  %80 = vmatprep.subr.bf16.mxu0 0
  %81 = vmatpush2.bf16.msra.mxu0 0
  %82 = vmatprep.subr.bf16.mxu0 0
  %83 = vmatpush2.bf16.msra.mxu0 0
  %84 = vmatprep.subr.bf16.mxu0 0
  %85 = vmatpush2.bf16.msra.mxu0 0
  %86 = vmatprep.mubr.bf16.mxu0 0
  %87 = vmatmul.mubr.bf16.gmra.mxu0 %v52
  %v88 = vpop.f32.mrf.mxu0
  %v89 = vadd.f32 0.0, %v88
  %v90 = vpop.f32.mrf.mxu0
  %v91 = vpop.f32.mrf.mxu0
  %v92 = vadd.f32 0.0, %v91
  %v93 = vpop.f32.mrf.mxu0
  %94 = vdwg.mxu0
  %v95 = vadd.f32 %v25, %v89
  %v96 = vadd.f32 %v26, %v92
  %97 = vst.msk [vmem:[#allocation2] sm:$0xff] %vm50, %v95
  %98 = vst.msk [vmem:[#allocation2 + $0x8] sm:$0xff] %vm50, %v96
  // Predicated region
  $region22: #{_lambda_.16} parent=0 // pred_check
    %p99 = pneg %p18
  $region23: #{_lambda_.16} parent=0 // pred_check_branch
    %101 = sbr.rel (%p99) target = $region25
  $region24: #{_lambda_.16} parent=0 // pred_region
    %v102 = vld [vmem:[#allocation2] sm:$0xff]
    %v103 = vld [vmem:[#allocation2 + $0x8] sm:$0xff]
    %v104 = vld [vmem:[%s2] sm:$0x1]
    %v106 = vlaneseq
    %v107 = vshrl.u32 %v106, 7
    %v108 = vsub.s32 0, %v107
    %v109 = vrot.slane %v104, %v108
    %v111 = vadd.f32 %v102, %v109
    %v112 = vadd.f32 %v103, %v109
    %v113 = vld [vmem:[%s3] sm:$0xff]
    %v114 = vld [vmem:[%s3 + $0x8] sm:$0xff]
    %v115 = vadd.f32 %v111, %v113
    %v116 = vadd.f32 %v112, %v114
    %117 = vst.msk [vmem:[%s4] sm:$0xff] %vm50, %v115
    %118 = vst.msk [vmem:[%s4 + $0x8] sm:$0xff] %vm50, %v116
  $region25: #{_lambda_.16} parent=0 // pred_fallthru
    _
  // Predicated region
  $region26: #{_lambda_.16} parent=0 // pred_check
    _
  $region27: #{_lambda_.16} parent=0 // pred_check_branch
    %120 = sbr.rel (0) target = $region29
  $region28: #{_lambda_.16} parent=0 // pred_region
    _
  $region29: #{_lambda_.16} parent=0 // pred_fallthru
    _
  // Predicated region
  $region30: #{_lambda_.16} parent=0 // pred_check
    _
  $region31: #{_lambda_.16} parent=0 // pred_check_branch
    %122 = sbr.rel (0) target = $region33
  $region32: #{_lambda_.16} parent=0 // pred_region
    _
  $region33: #{_lambda_.16} parent=0 // pred_fallthru
    _

// kernel: _lambda_.17
$region0: #{_lambda_.17}
  #allocation0 [shape = 'u32[]', space=smem, size = 0x4, offset = 0x4, fixed_abs, tag = 'smem constant byte address 0x4 - core index']
  #allocation1 [shape = 'u32[144,128]{1,0:T(1,128)}', space=vmem, size = 0x12000, scoped, tag = 'internal scratch']
  #allocation2 [shape = 'bf16[16,32]{1,0:T(8,128)(2,1)}', space=vmem, size = 0x1000, scoped, tag = 'scratch operand']
  %s0 = inlined_call_operand.vmem [shape: f32[16,32], index: 0, kind: input, shape index: {}]
  %s1 = inlined_call_operand.vmem [shape: f32[1,32], index: 1, kind: input, shape index: {}]
  %s2 = inlined_call_operand.vmem [shape: f32[1,32], index: 2, kind: input, shape index: {}]
  %s3 = inlined_call_operand.vmem [shape: bf16[32,64], index: 3, kind: input, shape index: {}]
  %s4 = inlined_call_operand.vmem [shape: f32[1,64], index: 4, kind: input, shape index: {}]
  %s5 = inlined_call_operand.vmem [shape: bf16[16,64], index: 5, kind: output, shape index: {}]
  %s6 = sld [smem:[#allocation0]]
  $region34: #{_lambda_.17} parent=0
    _
  %s8 = ssub.s32 1, %s6
  %s9 = scalar_select 0, %s8, %s6
  // Predicated region
  $region2: #{_lambda_.17} parent=0 // pred_check
    _
  $region3: #{_lambda_.17} parent=0 // pred_check_branch
    %11 = sbr.rel (0) target = $region5
  $region4: #{_lambda_.17} parent=0 // pred_region
    _
  $region5: #{_lambda_.17} parent=0 // pred_fallthru
    _
  // Predicated region
  $region6: #{_lambda_.17} parent=0 // pred_check
    _
  $region7: #{_lambda_.17} parent=0 // pred_check_branch
    %13 = sbr.rel (0) target = $region9
  $region8: #{_lambda_.17} parent=0 // pred_region
    _
  $region9: #{_lambda_.17} parent=0 // pred_fallthru
    _
  // Predicated region
  $region10: #{_lambda_.17} parent=0 // pred_check
    _
  $region11: #{_lambda_.17} parent=0 // pred_check_branch
    %15 = sbr.rel (0) target = $region13
  $region12: #{_lambda_.17} parent=0 // pred_region
    _
  $region13: #{_lambda_.17} parent=0 // pred_fallthru
    _
  // Predicated region
  $region14: #{_lambda_.17} parent=0 // pred_check
    _
  $region15: #{_lambda_.17} parent=0 // pred_check_branch
    %17 = sbr.rel (0) target = $region17
  $region16: #{_lambda_.17} parent=0 // pred_region
    _
  $region17: #{_lambda_.17} parent=0 // pred_fallthru
    _
  // Predicated region
  $region18: #{_lambda_.17} parent=0 // pred_check
    _
  $region19: #{_lambda_.17} parent=0 // pred_check_branch
    %19 = sbr.rel (0) target = $region21
  $region20: #{_lambda_.17} parent=0 // pred_region
    _
  $region21: #{_lambda_.17} parent=0 // pred_fallthru
    _
  %p21 = scmp.eq.s32.totalorder 0, 0
  // Predicated region
  $region22: #{_lambda_.17} parent=0 // pred_check
    %p22 = pneg %p21
  $region23: #{_lambda_.17} parent=0 // pred_check_branch
    %24 = sbr.rel (%p22) target = $region25
  $region24: #{_lambda_.17} parent=0 // pred_region
    %v25 = vld [vmem:[%s0] sm:$0xff]
    %v26 = vld [vmem:[%s0 + $0x8] sm:$0xff]
    %vm27 = vcmask 261120
    %v28 = vsel %vm27, %v25, 0.0
    %29 = vadd.xlane.f32.xlu0 %v28
    %v30 = vpop.xlane.xlu0 %29
    %v31 = vsel %vm27, %v26, 0.0
    %32 = vadd.xlane.f32.xlu0 %v31
    %v33 = vpop.xlane.xlu0 %32
    %v34 = vrcp.pop 32.0
    %v35 = vmul.f32 %v30, %v34
    %v36 = vmul.f32 %v33, %v34
    %v37 = vsub.f32 %v25, %v35
    %v38 = vsub.f32 %v26, %v36
    %v39 = vmul.f32 %v37, %v37
    %v40 = vmul.f32 %v38, %v38
    %v41 = vsel %vm27, %v39, 0.0
    %42 = vadd.xlane.f32.xlu0 %v41
    %v43 = vpop.xlane.xlu0 %42
    %v44 = vsel %vm27, %v40, 0.0
    %45 = vadd.xlane.f32.xlu0 %v44
    %v46 = vpop.xlane.xlu0 %45
    %v47 = vmul.f32 %v43, %v34
    %v48 = vmul.f32 %v46, %v34
    %v49 = vadd.f32 %v47, 1e-05
    %v50 = vadd.f32 %v48, 1e-05
    %v51 = vrsqrt.pop %v49
    %v52 = vrsqrt.pop %v50
    %v53 = vmul.f32 %v37, %v51
    %v54 = vmul.f32 %v38, %v52
    %v55 = vld [vmem:[%s1] sm:$0x1]
    %v57 = vlaneseq
    %v58 = vshrl.u32 %v57, 7
    %v59 = vsub.s32 0, %v58
    %v60 = vrot.slane %v55, %v59
    %v62 = vmul.f32 %v53, %v60
    %v63 = vmul.f32 %v54, %v60
    %v64 = vld [vmem:[%s2] sm:$0x1]
    %v66 = vlaneseq
    %v67 = vshrl.u32 %v66, 7
    %v68 = vsub.s32 0, %v67
    %v69 = vrot.slane %v64, %v68
    %v71 = vadd.f32 %v62, %v69
    %v72 = vadd.f32 %v63, %v69
    %v73 = vpack.c.bf16 %v72, %v71
    %v75 = vunpack.c.l.b16 %v73
    %v76 = vunpack.c.h.b16 %v73
    %v77 = vpack.c.b16 %v75, %v75
    %v78 = vpack.c.b16 %v76, %v76
    %vm81 = vcmask 257024
    %82 = vst.msk [vmem:[#allocation2] sm:$0xf] %vm81, %v77
    %83 = vst.msk [vmem:[#allocation2 + $0x4] sm:$0xf] %vm81, %v78
  $region25: #{_lambda_.17} parent=0 // pred_fallthru
    _
  %v84 = vld [vmem:[#allocation2] sm:$0xf]
  %v85 = vld [vmem:[#allocation2 + $0x4] sm:$0xf]
  %v86 = vld [vmem:[%s3] sm:$0xf]
  %v87 = vld [vmem:[%s3 + $0x4] sm:$0xf]
  %v88 = vld [vmem:[%s3 + $0x8] sm:$0xf]
  %v89 = vld [vmem:[%s3 + $0xc] sm:$0xf]
  %v90 = vld [vmem:[%s4] sm:$0x1]
  %v92 = vlaneseq
  %v93 = vshrl.u32 %v92, 7
  %v94 = vsub.s32 0, %v93
  %v95 = vrot.slane %v90, %v94
  %v99 = vunpack.c.l.b16 %v84
  %v100 = vunpack.c.l.b16 %v85
  %v101 = vpack.c.b16 %v100, %v99
  %v106 = vunpack.c.l.b16 %v86
  %v107 = vunpack.c.l.b16 %v87
  %v108 = vunpack.c.l.b16 %v88
  %v109 = vunpack.c.l.b16 %v89
  %v110 = vpack.c.b16 %v107, %v106
  %v111 = vpack.c.b16 %v109, %v108
  %vm114 = vcmask 261120
  %v116 = vsel %vm114, %v101, 0
  %118 = vmatprep.subr.bf16.mxu0 0
  %119 = vmatpush1.bf16.msra.mxu0 0
  %120 = vmatprep.subr.bf16.mxu0 0
  %121 = vmatpush1.bf16.msra.mxu0 0
  %122 = vmatprep.subr.bf16.mxu0 0
  %123 = vmatpush1.bf16.msra.mxu0 0
  %124 = vmatprep.subr.bf16.mxu0 0
  %125 = vmatpush1.bf16.msra.mxu0 0
  %126 = vmatprep.subr.bf16.mxu0 0
  %127 = vmatpush1.bf16.msra.mxu0 0
  %128 = vmatprep.subr.bf16.mxu0 0
  %129 = vmatpush1.bf16.msra.mxu0 0
  %130 = vmatprep.subr.bf16.mxu0 0
  %131 = vmatpush1.bf16.msra.mxu0 %v111
  %132 = vmatprep.subr.bf16.mxu0 0
  %133 = vmatpush1.bf16.msra.mxu0 %v110
  %134 = vmatprep.subr.bf16.mxu0 0
  %135 = vmatpush2.bf16.msra.mxu0 0
  %136 = vmatprep.subr.bf16.mxu0 0
  %137 = vmatpush2.bf16.msra.mxu0 0
  %138 = vmatprep.subr.bf16.mxu0 0
  %139 = vmatpush2.bf16.msra.mxu0 0
  %140 = vmatprep.subr.bf16.mxu0 0
  %141 = vmatpush2.bf16.msra.mxu0 0
  %142 = vmatprep.subr.bf16.mxu0 0
  %143 = vmatpush2.bf16.msra.mxu0 0
  %144 = vmatprep.subr.bf16.mxu0 0
  %145 = vmatpush2.bf16.msra.mxu0 0
  %146 = vmatprep.subr.bf16.mxu0 0
  %147 = vmatpush2.bf16.msra.mxu0 0
  %148 = vmatprep.subr.bf16.mxu0 0
  %149 = vmatpush2.bf16.msra.mxu0 0
  %150 = vmatprep.mubr.bf16.mxu0 0
  %151 = vmatmul.mubr.bf16.gmra.mxu0 %v116
  %v152 = vpop.f32.mrf.mxu0
  %v153 = vadd.f32 %v95, %v152
  %v154 = vpop.f32.mrf.mxu0
  %v155 = vpop.f32.mrf.mxu0
  %v156 = vadd.f32 %v95, %v155
  %v157 = vpop.f32.mrf.mxu0
  %158 = vdwg.mxu0
  %v159 = vmul.f32 %v153, 0.5
  %v160 = vmul.f32 %v156, 0.5
  %v161 = vmul.f32 %v153, 0.70710677
  %v162 = vmul.f32 %v156, 0.70710677
  %v163 = verf.f32.pop %v161
  %v164 = verf.f32.pop %v162
  %v165 = vadd.f32 %v163, 1.0
  %v166 = vadd.f32 %v164, 1.0
  %v167 = vmul.f32 %v159, %v165
  %v168 = vmul.f32 %v160, %v166
  %v169 = vpack.c.bf16 %v168, %v167
  %v171 = vunpack.c.l.b16 %v169
  %v172 = vunpack.c.h.b16 %v169
  %v173 = vpack.c.b16 %v171, %v171
  %v174 = vpack.c.b16 %v172, %v172
  %vm177 = vcmask 519168
  %178 = vst.msk [vmem:[%s5] sm:$0xf] %vm177, %v173
  %179 = vst.msk [vmem:[%s5 + $0x4] sm:$0xf] %vm177, %v174
  // Predicated region
  $region26: #{_lambda_.17} parent=0 // pred_check
    _
  $region27: #{_lambda_.17} parent=0 // pred_check_branch
    %181 = sbr.rel (0) target = $region29
  $region28: #{_lambda_.17} parent=0 // pred_region
    _
  $region29: #{_lambda_.17} parent=0 // pred_fallthru
    _
  // Predicated region
  $region30: #{_lambda_.17} parent=0 // pred_check
    _
  $region31: #{_lambda_.17} parent=0 // pred_check_branch
    %183 = sbr.rel (0) target = $region33
  $region32: #{_lambda_.17} parent=0 // pred_region
    _
  $region33: #{_lambda_.17} parent=0 // pred_fallthru
    _

// kernel: _lambda_.18
$region0: #{_lambda_.18}
  #allocation0 [shape = 'u32[]', space=smem, size = 0x4, offset = 0x4, fixed_abs, tag = 'smem constant byte address 0x4 - core index']
  #allocation1 [shape = 'u32[144,128]{1,0:T(1,128)}', space=vmem, size = 0x12000, scoped, tag = 'internal scratch']
  #allocation2 [shape = 'f32[16,32]{1,0:T(8,128)}', space=vmem, size = 0x2000, scoped, tag = 'scratch operand']
  %s0 = inlined_call_operand.vmem [shape: bf16[16,64], index: 0, kind: input, shape index: {}]
  %s1 = inlined_call_operand.vmem [shape: bf16[64,32], index: 1, kind: input, shape index: {}]
  %s2 = inlined_call_operand.vmem [shape: f32[1,32], index: 2, kind: input, shape index: {}]
  %s3 = inlined_call_operand.vmem [shape: f32[16,32], index: 3, kind: input, shape index: {}]
  %s4 = inlined_call_operand.vmem [shape: f32[16,32], index: 4, kind: output, shape index: {}]
  %s5 = sld [smem:[#allocation0]]
  $region34: #{_lambda_.18} parent=0
    _
  %s7 = ssub.s32 1, %s5
  %s8 = scalar_select 0, %s7, %s5
  // Predicated region
  $region2: #{_lambda_.18} parent=0 // pred_check
    _
  $region3: #{_lambda_.18} parent=0 // pred_check_branch
    %10 = sbr.rel (0) target = $region5
  $region4: #{_lambda_.18} parent=0 // pred_region
    _
  $region5: #{_lambda_.18} parent=0 // pred_fallthru
    _
  // Predicated region
  $region6: #{_lambda_.18} parent=0 // pred_check
    _
  $region7: #{_lambda_.18} parent=0 // pred_check_branch
    %12 = sbr.rel (0) target = $region9
  $region8: #{_lambda_.18} parent=0 // pred_region
    _
  $region9: #{_lambda_.18} parent=0 // pred_fallthru
    _
  // Predicated region
  $region10: #{_lambda_.18} parent=0 // pred_check
    _
  $region11: #{_lambda_.18} parent=0 // pred_check_branch
    %14 = sbr.rel (0) target = $region13
  $region12: #{_lambda_.18} parent=0 // pred_region
    _
  $region13: #{_lambda_.18} parent=0 // pred_fallthru
    _
  // Predicated region
  $region14: #{_lambda_.18} parent=0 // pred_check
    _
  $region15: #{_lambda_.18} parent=0 // pred_check_branch
    %16 = sbr.rel (0) target = $region17
  $region16: #{_lambda_.18} parent=0 // pred_region
    _
  $region17: #{_lambda_.18} parent=0 // pred_fallthru
    _
  %p18 = scmp.eq.s32.totalorder 0, 0
  // Predicated region
  $region18: #{_lambda_.18} parent=0 // pred_check
    %p19 = pneg %p18
  $region19: #{_lambda_.18} parent=0 // pred_check_branch
    %21 = sbr.rel (%p19) target = $region21
  $region20: #{_lambda_.18} parent=0 // pred_region
    %vm22 = vcmask 261120
    %23 = vst.msk [vmem:[#allocation2] sm:$0xff] %vm22, 0.0
    %24 = vst.msk [vmem:[#allocation2 + $0x8] sm:$0xff] %vm22, 0.0
  $region21: #{_lambda_.18} parent=0 // pred_fallthru
    _
  %v25 = vld [vmem:[#allocation2] sm:$0xff]
  %v26 = vld [vmem:[#allocation2 + $0x8] sm:$0xff]
  %v27 = vld [vmem:[%s0] sm:$0xf]
  %v28 = vld [vmem:[%s0 + $0x4] sm:$0xf]
  %v29 = vld [vmem:[%s1] sm:$0xf]
  %v30 = vld [vmem:[%s1 + $0x4] sm:$0xf]
  %v31 = vld [vmem:[%s1 + $0x8] sm:$0xf]
  %v32 = vld [vmem:[%s1 + $0xc] sm:$0xf]
  %v33 = vld [vmem:[%s1 + $0x10] sm:$0xf]
  %v34 = vld [vmem:[%s1 + $0x14] sm:$0xf]
  %v35 = vld [vmem:[%s1 + $0x18] sm:$0xf]
  %v36 = vld [vmem:[%s1 + $0x1c] sm:$0xf]
  %v39 = vunpack.c.l.b16 %v27
  %v40 = vunpack.c.l.b16 %v28
  %v41 = vpack.c.b16 %v40, %v39
  %v50 = vunpack.c.l.b16 %v29
  %v51 = vunpack.c.l.b16 %v30
  %v52 = vunpack.c.l.b16 %v31
  %v53 = vunpack.c.l.b16 %v32
  %v54 = vunpack.c.l.b16 %v33
  %v55 = vunpack.c.l.b16 %v34
  %v56 = vunpack.c.l.b16 %v35
  %v57 = vunpack.c.l.b16 %v36
  %v58 = vpack.c.b16 %v51, %v50
  %v59 = vpack.c.b16 %v53, %v52
  %v60 = vpack.c.b16 %v55, %v54
  %v61 = vpack.c.b16 %v57, %v56
  %vm66 = vcmask 523264
  %v68 = vsel %vm66, %v41, 0
  %70 = vmatprep.subr.bf16.mxu0 0
  %71 = vmatpush1.bf16.msra.mxu0 0
  %72 = vmatprep.subr.bf16.mxu0 0
  %73 = vmatpush1.bf16.msra.mxu0 0
  %74 = vmatprep.subr.bf16.mxu0 0
  %75 = vmatpush1.bf16.msra.mxu0 0
  %76 = vmatprep.subr.bf16.mxu0 0
  %77 = vmatpush1.bf16.msra.mxu0 0
  %78 = vmatprep.subr.bf16.mxu0 0
  %79 = vmatpush1.bf16.msra.mxu0 %v61
  %80 = vmatprep.subr.bf16.mxu0 0
  %81 = vmatpush1.bf16.msra.mxu0 %v60
  %82 = vmatprep.subr.bf16.mxu0 0
  %83 = vmatpush1.bf16.msra.mxu0 %v59
  %84 = vmatprep.subr.bf16.mxu0 0
  %85 = vmatpush1.bf16.msra.mxu0 %v58
  %86 = vmatprep.subr.bf16.mxu0 0
  %87 = vmatpush2.bf16.msra.mxu0 0
  %88 = vmatprep.subr.bf16.mxu0 0
  %89 = vmatpush2.bf16.msra.mxu0 0
  %90 = vmatprep.subr.bf16.mxu0 0
  %91 = vmatpush2.bf16.msra.mxu0 0
  %92 = vmatprep.subr.bf16.mxu0 0
  %93 = vmatpush2.bf16.msra.mxu0 0
  %94 = vmatprep.subr.bf16.mxu0 0
  %95 = vmatpush2.bf16.msra.mxu0 0
  %96 = vmatprep.subr.bf16.mxu0 0
  %97 = vmatpush2.bf16.msra.mxu0 0
  %98 = vmatprep.subr.bf16.mxu0 0
  %99 = vmatpush2.bf16.msra.mxu0 0
  %100 = vmatprep.subr.bf16.mxu0 0
  %101 = vmatpush2.bf16.msra.mxu0 0
  %102 = vmatprep.mubr.bf16.mxu0 0
  %103 = vmatmul.mubr.bf16.gmra.mxu0 %v68
  %v104 = vpop.f32.mrf.mxu0
  %v105 = vadd.f32 0.0, %v104
  %v106 = vpop.f32.mrf.mxu0
  %v107 = vpop.f32.mrf.mxu0
  %v108 = vadd.f32 0.0, %v107
  %v109 = vpop.f32.mrf.mxu0
  %110 = vdwg.mxu0
  %v111 = vadd.f32 %v25, %v105
  %v112 = vadd.f32 %v26, %v108
  %vm113 = vcmask 261120
  %114 = vst.msk [vmem:[#allocation2] sm:$0xff] %vm113, %v111
  %115 = vst.msk [vmem:[#allocation2 + $0x8] sm:$0xff] %vm113, %v112
  // Predicated region
  $region22: #{_lambda_.18} parent=0 // pred_check
    %p116 = pneg %p18
  $region23: #{_lambda_.18} parent=0 // pred_check_branch
    %118 = sbr.rel (%p116) target = $region25
  $region24: #{_lambda_.18} parent=0 // pred_region
    %v119 = vld [vmem:[#allocation2] sm:$0xff]
    %v120 = vld [vmem:[#allocation2 + $0x8] sm:$0xff]
    %v121 = vld [vmem:[%s2] sm:$0x1]
    %v123 = vlaneseq
    %v124 = vshrl.u32 %v123, 7
    %v125 = vsub.s32 0, %v124
    %v126 = vrot.slane %v121, %v125
    %v128 = vadd.f32 %v119, %v126
    %v129 = vadd.f32 %v120, %v126
    %v130 = vld [vmem:[%s3] sm:$0xff]
    %v131 = vld [vmem:[%s3 + $0x8] sm:$0xff]
    %v132 = vadd.f32 %v128, %v130
    %v133 = vadd.f32 %v129, %v131
    %134 = vst.msk [vmem:[%s4] sm:$0xff] %vm113, %v132
    %135 = vst.msk [vmem:[%s4 + $0x8] sm:$0xff] %vm113, %v133
  $region25: #{_lambda_.18} parent=0 // pred_fallthru
    _
  // Predicated region
  $region26: #{_lambda_.18} parent=0 // pred_check
    _
  $region27: #{_lambda_.18} parent=0 // pred_check_branch
    %137 = sbr.rel (0) target = $region29
  $region28: #{_lambda_.18} parent=0 // pred_region
    _
  $region29: #{_lambda_.18} parent=0 // pred_fallthru
    _
  // Predicated region
  $region30: #{_lambda_.18} parent=0 // pred_check
    _
  $region31: #{_lambda_.18} parent=0 // pred_check_branch
    %139 = sbr.rel (0) target = $region33
  $region32: #{_lambda_.18} parent=0 // pred_region
    _
  $region33: #{_lambda_.18} parent=0 // pred_fallthru
    _

</llo_original>
